<compile_context>
chip_gen: v5e
topology: v5e:2x2
jax: 0.10.0
libtpu: 0.0.40
codegen_flags: <defaults>
</compile_context>

<pallas_src>
import functools
import math

import jax
import jax.numpy as jnp
from jax import lax
from jax.experimental import pallas as pl
from jax.experimental.pallas import tpu as pltpu

_LN_EPS = 1e-5  # PyTorch TransformerEncoderLayer default


@functools.lru_cache(maxsize=None)
def _vmem_limit():
    # ~3/4 of physical VMEM, capped at 96 MiB (v5e/v6e: 96 of 128 MiB,
    # v7x: 48 of 64 MiB).  Falls back to a 48 MiB budget if the query fails.
    try:
        cap = pltpu.get_tpu_info().vmem_capacity_bytes
    except Exception:
        cap = 64 * 1024 * 1024
    return int(max(32 * 1024 * 1024, min(cap * 3 // 4, 96 * 1024 * 1024)))


def _round_up(x, m):
    return (x + m - 1) // m * m


def _tile_and_pad(dim, target):
    """Largest 128-aligned tile <= target; pad dim to a multiple of the tile."""
    t = min(target, _round_up(dim, 128))
    return t, _round_up(dim, t)


def _seq_tile(s, target=256):
    """Sequence tile: a multiple of 8 dividing S (or S itself for small S)."""
    for t in (target, 128):
        if s >= t and s % t == 0:
            return t
    return s


def _pad2(a, rows, cols):
    r, c = a.shape
    if (r, c) == (rows, cols):
        return a
    return jnp.pad(a, ((0, rows - r), (0, cols - c)))


def _layernorm(h, gamma, beta, eps=_LN_EPS):
    mu = jnp.mean(h, axis=-1, keepdims=True)
    var = jnp.mean((h - mu) ** 2, axis=-1, keepdims=True)
    return (h - mu) * lax.rsqrt(var + eps) * gamma + beta


# --------------------------- tiled linear (matmul) ---------------------------

def matmul_kernel(x_ref, w_ref, b_ref, o_ref, acc_ref):
    @pl.when(pl.program_id(2) == 0)
    def _():
        acc_ref[...] = jnp.zeros_like(acc_ref)

    acc_ref[...] += jnp.dot(x_ref[...], w_ref[...],
                            preferred_element_type=jnp.float32)

    @pl.when(pl.program_id(2) == pl.num_programs(2) - 1)
    def _():
        o_ref[...] = (acc_ref[...] + b_ref[...]).astype(o_ref.dtype)


def linear(x, w, b, *, out_dtype=jnp.bfloat16, tm=256, tn=256, tk=512):
    M, K = x.shape
    N = w.shape[1]
    tm, Mp = _tile_and_pad(M, tm)
    tn, Np = _tile_and_pad(N, tn)
    tk, Kp = _tile_and_pad(K, tk)
    xp = _pad2(x.astype(jnp.bfloat16), Mp, Kp)
    wp = _pad2(w.astype(jnp.bfloat16), Kp, Np)
    bp = _pad2(b.reshape(1, N).astype(jnp.float32), 1, Np)
    out = pl.pallas_call(
        matmul_kernel,
        out_shape=jax.ShapeDtypeStruct((Mp, Np), out_dtype),
        grid_spec=pltpu.PrefetchScalarGridSpec(
            num_scalar_prefetch=0,
            grid=(Mp // tm, Np // tn, Kp // tk),
            in_specs=[
                pl.BlockSpec((tm, tk), lambda i, j, k: (i, k)),
                pl.BlockSpec((tk, tn), lambda i, j, k: (k, j)),
                pl.BlockSpec((1, tn), lambda i, j, k: (0, j)),
            ],
            out_specs=pl.BlockSpec((tm, tn), lambda i, j, k: (i, j)),
            scratch_shapes=[pltpu.VMEM((tm, tn), jnp.float32)],
        ),
        compiler_params=pltpu.CompilerParams(
            dimension_semantics=("parallel", "parallel", "arbitrary"),
            vmem_limit_bytes=_vmem_limit(),
        ),
    )(xp, wp, bp)
    return out[:M, :N]


# ------------------------- fused attention-block kernel ----------------------

def attn_block_kernel(prefix_ref, xf_ref, xq_ref, wq_ref, bq_ref, wkv_ref,
                      bkv_ref, wo_ref, bo_ref, g_ref, beta_ref, o_ref,
                      kv_ref, proj_ref, *, nhead, dh, tq, scale):
    qi = pl.program_id(1)
    S = xf_ref.shape[1]

    # K/V projection for the full sequence, done once per batch element
    # (first q-tile) into a persistent head-major bf16 VMEM scratch.
    @pl.when(qi == 0)
    def _():
        x_full = xf_ref[0]                                      # (S, D) bf16

        @pl.loop(0, nhead)
        def _(h):
            kv = jnp.dot(x_full, wkv_ref[h],
                         preferred_element_type=jnp.float32) + bkv_ref[h]
            kv_ref[h] = kv.astype(jnp.bfloat16)                 # (S, 2*dh)

    x_q = xq_ref[0]                                             # (tq, D) bf16

    # Causal + prefix mask built in-kernel (no (S, S) HBM mask traffic).
    rows = qi * tq + lax.broadcasted_iota(jnp.int32, (tq, S), 0)
    cols = lax.broadcasted_iota(jnp.int32, (tq, S), 1)
    allowed = (cols <= rows) | (cols < prefix_ref[0])

    proj_ref[...] = jnp.zeros_like(proj_ref)

    @pl.loop(0, nhead)
    def _(h):
        q = jnp.dot(x_q, wq_ref[h],
                    preferred_element_type=jnp.float32) + bq_ref[h]   # (tq, dh)
        kv = kv_ref[h]                                                # (S, 2*dh)
        k = kv[:, :dh]
        v = kv[:, dh:]
        s = lax.dot_general((q * scale).astype(jnp.bfloat16), k,
                            (((1,), (1,)), ((), ())),
                            preferred_element_type=jnp.float32)       # (tq, S)
        s = jnp.where(allowed, s, -jnp.inf)
        s = s - jnp.max(s, axis=-1, keepdims=True)                    # f32 softmax
        p = jnp.exp(s)
        p = p * pl.reciprocal(jnp.sum(p, axis=-1, keepdims=True), approx=True)
        o_h = jnp.dot(p.astype(jnp.bfloat16), v,
                      preferred_element_type=jnp.float32)             # (tq, dh)
        proj_ref[...] += jnp.dot(o_h.astype(jnp.bfloat16), wo_ref[h],
                                 preferred_element_type=jnp.float32)

    attn = proj_ref[...] + bo_ref[...]
    y = x_q.astype(jnp.float32) + attn          # residual (dropout == identity)
    o_ref[0] = _layernorm(y, g_ref[...], beta_ref[...]).astype(o_ref.dtype)


def attention_block(x, layer, prefix, nhead):
    B, S, D = x.shape
    dh = D // nhead
    tq = _seq_tile(S)
    nq = S // tq
    scale = 1.0 / math.sqrt(dh)
    kern = functools.partial(attn_block_kernel, nhead=nhead, dh=dh, tq=tq,
                             scale=scale)
    return pl.pallas_call(
        kern,
        out_shape=jax.ShapeDtypeStruct((B, S, D), jnp.bfloat16),
        grid_spec=pltpu.PrefetchScalarGridSpec(
            num_scalar_prefetch=1,
            grid=(B, nq),
            in_specs=[
                pl.BlockSpec((1, S, D), lambda b, q, p: (b, 0, 0)),   # full seq
                pl.BlockSpec((1, tq, D), lambda b, q, p: (b, q, 0)),  # q tile
                pl.BlockSpec((nhead, D, dh), lambda b, q, p: (0, 0, 0)),
                pl.BlockSpec((nhead, 1, dh), lambda b, q, p: (0, 0, 0)),
                pl.BlockSpec((nhead, D, 2 * dh), lambda b, q, p: (0, 0, 0)),
                pl.BlockSpec((nhead, 1, 2 * dh), lambda b, q, p: (0, 0, 0)),
                pl.BlockSpec((nhead, dh, D), lambda b, q, p: (0, 0, 0)),
                pl.BlockSpec((1, D), lambda b, q, p: (0, 0)),
                pl.BlockSpec((1, D), lambda b, q, p: (0, 0)),
                pl.BlockSpec((1, D), lambda b, q, p: (0, 0)),
            ],
            out_specs=pl.BlockSpec((1, tq, D), lambda b, q, p: (b, q, 0)),
            scratch_shapes=[
                pltpu.VMEM((nhead, S, 2 * dh), jnp.bfloat16),   # K|V per head
                pltpu.VMEM((tq, D), jnp.float32),               # out-proj acc
            ],
        ),
        compiler_params=pltpu.CompilerParams(
            # q axis "arbitrary": tiles qi>0 reuse the K/V scratch from qi==0.
            dimension_semantics=("parallel", "arbitrary"),
            vmem_limit_bytes=_vmem_limit(),
        ),
    )(prefix, x, x, layer["wq"], layer["bq"], layer["wkv"], layer["bkv"],
      layer["wo"], layer["bo"], layer["ln1_g"], layer["ln1_b"])


# ------------------------ fused feed-forward-block kernel --------------------

def ffn_block_kernel(x_ref, w1_ref, b1_ref, w2_ref, b2_ref, g_ref, beta_ref,
                     o_ref):
    x = x_ref[0]                                                # (ts, D) bf16
    h = jnp.dot(x, w1_ref[...], preferred_element_type=jnp.float32) + b1_ref[...]
    h = jnp.maximum(h, 0.0).astype(jnp.bfloat16)                # ReLU, bf16 hidden
    y = jnp.dot(h, w2_ref[...], preferred_element_type=jnp.float32) + b2_ref[...]
    y = x.astype(jnp.float32) + y                               # residual (f32)
    o_ref[0] = _layernorm(y, g_ref[...], beta_ref[...]).astype(o_ref.dtype)


def ffn_block(x, layer):
    B, S, D = x.shape
    F = layer["ff1_w"].shape[1]
    ts = _seq_tile(S)
    ns = S // ts
    return pl.pallas_call(
        ffn_block_kernel,
        out_shape=jax.ShapeDtypeStruct((B, S, D), jnp.bfloat16),
        grid_spec=pltpu.PrefetchScalarGridSpec(
            num_scalar_prefetch=0,
            grid=(B, ns),
            in_specs=[
                pl.BlockSpec((1, ts, D), lambda b, s: (b, s, 0)),
                pl.BlockSpec((D, F), lambda b, s: (0, 0)),
                pl.BlockSpec((1, F), lambda b, s: (0, 0)),
                pl.BlockSpec((F, D), lambda b, s: (0, 0)),
                pl.BlockSpec((1, D), lambda b, s: (0, 0)),
                pl.BlockSpec((1, D), lambda b, s: (0, 0)),
                pl.BlockSpec((1, D), lambda b, s: (0, 0)),
            ],
            out_specs=pl.BlockSpec((1, ts, D), lambda b, s: (b, s, 0)),
        ),
        compiler_params=pltpu.CompilerParams(
            dimension_semantics=("parallel", "parallel"),
            vmem_limit_bytes=_vmem_limit(),
        ),
    )(x, layer["ff1_w"], layer["ff1_b"], layer["ff2_w"], layer["ff2_b"],
      layer["ln2_g"], layer["ln2_b"])


# ------------------------------ model definition ------------------------------

def init_params(key, dinp, dhid, nhead, dout, nlayers):
    dh = dhid // nhead

    def u(k, shape, scale=0.1):
        return jax.random.uniform(k, shape, jnp.float32, -scale, scale)

    def bf16(a):
        return a.astype(jnp.bfloat16)

    keys = jax.random.split(key, 3)
    params = {
        "enc_w": bf16(u(keys[0], (dinp, dhid))),     # encoder1: Linear(dinp, dhid)
        "enc_b": u(keys[1], (dhid,)),
        "dec_w": bf16(u(keys[2], (dhid, dout))),     # decoder: uniform(-0.1, 0.1)
        "dec_b": jnp.zeros((dout,), jnp.float32),    # decoder bias zeroed
        "layers": [],
    }
    for l in range(nlayers):
        lk = jax.random.split(jax.random.fold_in(key, 100 + l), 8)
        # Weights stored in "x @ W" layout (== PyTorch weight.T), split head-major
        # so the kernel indexes heads on the leading dim (no lane slicing).
        w_inproj = u(lk[0], (dhid, 3 * dhid))
        b_inproj = u(lk[1], (3 * dhid,))
        w_out = u(lk[2], (dhid, dhid))

        def per_head(m):                              # (D, D) -> (nhead, D, dh)
            return m.reshape(dhid, nhead, dh).transpose(1, 0, 2)

        wq = per_head(w_inproj[:, :dhid])
        wk = per_head(w_inproj[:, dhid:2 * dhid])
        wv = per_head(w_inproj[:, 2 * dhid:])
        bq = b_inproj[:dhid].reshape(nhead, 1, dh)
        bk = b_inproj[dhid:2 * dhid].reshape(nhead, 1, dh)
        bv = b_inproj[2 * dhid:].reshape(nhead, 1, dh)
        params["layers"].append({
            "wq": bf16(wq),
            "bq": bq,
            "wkv": bf16(jnp.concatenate([wk, wv], axis=-1)),     # (nhead, D, 2dh)
            "bkv": jnp.concatenate([bk, bv], axis=-1),           # (nhead, 1, 2dh)
            "wo": bf16(w_out.reshape(nhead, dh, dhid)),          # (nhead, dh, D)
            "bo": u(lk[3], (dhid,)).reshape(1, dhid),
            "ff1_w": bf16(u(lk[4], (dhid, dhid))),               # dim_feedforward == dhid
            "ff1_b": u(lk[5], (dhid,)).reshape(1, dhid),
            "ff2_w": bf16(u(lk[6], (dhid, dhid))),
            "ff2_b": u(lk[7], (dhid,)).reshape(1, dhid),
            "ln1_g": jnp.ones((1, dhid), jnp.float32),
            "ln1_b": jnp.zeros((1, dhid), jnp.float32),
            "ln2_g": jnp.ones((1, dhid), jnp.float32),
            "ln2_b": jnp.zeros((1, dhid), jnp.float32),
        })
    return params


def transformer_causal_forward(src, params, *, nhead, prefix_length=1):
    # src: (S, B, dinp) seq-first (PyTorch batch_first=False).
    # The causal+prefix mask (== generate_square_subsequent_mask(S, prefix_length))
    # is generated inside the attention kernel from `prefix_length`.
    S, B, dinp = src.shape
    dhid = params["enc_w"].shape[1]

    # single layout change at the model boundary; activations flow in bf16
    x = jnp.transpose(src, (1, 0, 2)).astype(jnp.bfloat16)       # (B, S, dinp)
    x = linear(x.reshape(B * S, dinp), params["enc_w"], params["enc_b"],
               out_dtype=jnp.bfloat16)
    x = x.reshape(B, S, dhid)

    prefix = jnp.full((1,), prefix_length, jnp.int32)
    for layer in params["layers"]:
        x = attention_block(x, layer, prefix, nhead)   # attn + resid + LN1
        x = ffn_block(x, layer)                        # FFN + resid + LN2

    out = linear(x.reshape(B * S, dhid), params["dec_w"], params["dec_b"],
                 out_dtype=jnp.float32)
    return jnp.transpose(out.reshape(B, S, -1), (1, 0, 2))       # (S, B, dout)


# ----------------------------------- main -------------------------------------

if __name__ == "__main__":
    S, B = 8, 2
    dinp, dhid, nhead, nlayers, dout = 16, 32, 2, 2, 8

    key = jax.random.PRNGKey(0)
    k_param, k_src = jax.random.split(key)

    params = init_params(k_param, dinp, dhid, nhead, dout, nlayers)
    src = jax.random.normal(k_src, (S, B, dinp), dtype=jnp.float32)

    fwd = jax.jit(functools.partial(transformer_causal_forward,
                                    nhead=nhead, prefix_length=1))
    out = jax.block_until_ready(fwd(src, params))

    assert out.shape == (S, B, dout), out.shape
    assert bool(jnp.all(jnp.isfinite(out)))
    print("KERNEL_OK")
</pallas_src>

<mosaic_0001>
module attributes {stable_mosaic.version = 11 : i64} {
  func.func @matmul_kernel(%arg0: i32, %arg1: i32, %arg2: i32, %arg3: memref<128x128xbf16, #tpu.memory_space<vmem>>, %arg4: memref<128x128xbf16, #tpu.memory_space<vmem>>, %arg5: memref<1x128xf32, #tpu.memory_space<vmem>>, %arg6: memref<128x128xbf16, #tpu.memory_space<vmem>>, %arg7: memref<128x128xf32, #tpu.memory_space<vmem>>) attributes {dimension_semantics = [#tpu.dimension_semantics<parallel>, #tpu.dimension_semantics<parallel>, #tpu.dimension_semantics<arbitrary>], iteration_bounds = array<i64: 1, 1, 1>, scalar_prefetch = 0 : i64, scratch_operands = 1 : i64, tpu.core_type = #tpu.core_type<tc>, window_params = [{transform_indices = @transform_0, window_bounds = array<i64: 128, 128>}, {transform_indices = @transform_1, window_bounds = array<i64: 128, 128>}, {transform_indices = @transform_2, window_bounds = array<i64: 1, 128>}, {transform_indices = @transform_3, window_bounds = array<i64: 128, 128>}]} {
    %c0_i32 = arith.constant 0 : i32
    %0 = arith.cmpi eq, %arg2, %c0_i32 : i32
    %1 = arith.extui %0 : i1 to i32
    %c0_i32_0 = arith.constant 0 : i32
    %2 = arith.cmpi ne, %1, %c0_i32_0 : i32
    scf.if %2 {
      %cst_10 = arith.constant 0.000000e+00 : f32
      %12 = vector.broadcast %cst_10 : f32 to vector<128x128xf32>
      %c0_11 = arith.constant 0 : index
      %c0_12 = arith.constant 0 : index
      %13 = vector.load %arg7[%c0_11, %c0_12] : memref<128x128xf32, #tpu.memory_space<vmem>>, vector<128x128xf32>
      tpu.vector_store %arg7[%c0_11, %c0_12], %12 {strides = array<i32>} : memref<128x128xf32, #tpu.memory_space<vmem>>, vector<128x128xf32>,
    } else {
    }
    %c0 = arith.constant 0 : index
    %c0_1 = arith.constant 0 : index
    %3 = vector.load %arg7[%c0, %c0_1] : memref<128x128xf32, #tpu.memory_space<vmem>>, vector<128x128xf32>
    %c0_2 = arith.constant 0 : index
    %c0_3 = arith.constant 0 : index
    %4 = vector.load %arg3[%c0_2, %c0_3] : memref<128x128xbf16, #tpu.memory_space<vmem>>, vector<128x128xbf16>
    %c0_4 = arith.constant 0 : index
    %c0_5 = arith.constant 0 : index
    %5 = vector.load %arg4[%c0_4, %c0_5] : memref<128x128xbf16, #tpu.memory_space<vmem>>, vector<128x128xbf16>
    %cst = arith.constant dense<0.000000e+00> : vector<128x128xf32>
    %6 = tpu.matmul %4, %5, %cst {dimension_numbers = #tpu.dot_dimension_numbers<[1], [0], [0], [1], [0, 0, 1, 1], [], []>} : vector<128x128xbf16>, vector<128x128xbf16>, vector<128x128xf32> -> vector<128x128xf32>
    %7 = arith.addf %3, %6 : vector<128x128xf32>
    %c0_6 = arith.constant 0 : index
    %c0_7 = arith.constant 0 : index
    %8 = vector.load %arg7[%c0_6, %c0_7] : memref<128x128xf32, #tpu.memory_space<vmem>>, vector<128x128xf32>
    tpu.vector_store %arg7[%c0_6, %c0_7], %7 {strides = array<i32>} : memref<128x128xf32, #tpu.memory_space<vmem>>, vector<128x128xf32>,
    %c0_i32_8 = arith.constant 0 : i32
    %9 = arith.cmpi eq, %arg2, %c0_i32_8 : i32
    %10 = arith.extui %9 : i1 to i32
    %c0_i32_9 = arith.constant 0 : i32
    %11 = arith.cmpi ne, %10, %c0_i32_9 : i32
    scf.if %11 {
      %c0_10 = arith.constant 0 : index
      %c0_11 = arith.constant 0 : index
      %12 = vector.load %arg7[%c0_10, %c0_11] : memref<128x128xf32, #tpu.memory_space<vmem>>, vector<128x128xf32>
      %c0_12 = arith.constant 0 : index
      %c0_13 = arith.constant 0 : index
      %13 = vector.load %arg5[%c0_12, %c0_13] : memref<1x128xf32, #tpu.memory_space<vmem>>, vector<1x128xf32>
      %14 = vector.broadcast %13 : vector<1x128xf32> to vector<128x128xf32>
      %15 = arith.addf %12, %14 : vector<128x128xf32>
      %16 = arith.truncf %15 : vector<128x128xf32> to vector<128x128xbf16>
      %c0_14 = arith.constant 0 : index
      %c0_15 = arith.constant 0 : index
      %17 = vector.load %arg6[%c0_14, %c0_15] : memref<128x128xbf16, #tpu.memory_space<vmem>>, vector<128x128xbf16>
      tpu.vector_store %arg6[%c0_14, %c0_15], %16 {strides = array<i32>} : memref<128x128xbf16, #tpu.memory_space<vmem>>, vector<128x128xbf16>,
    } else {
    }
    return
  }
  func.func @transform_0(%arg0: i32, %arg1: i32, %arg2: i32) -> (i32, i32) {
    %c0_i32 = arith.constant 0 : i32
    return %arg0, %arg2 : i32, i32
  }
  func.func @transform_1(%arg0: i32, %arg1: i32, %arg2: i32) -> (i32, i32) {
    %c0_i32 = arith.constant 0 : i32
    return %arg2, %arg1 : i32, i32
  }
  func.func @transform_2(%arg0: i32, %arg1: i32, %arg2: i32) -> (i32, i32) {
    %c0_i32 = arith.constant 0 : i32
    %c0_i32_0 = arith.constant 0 : i32
    return %c0_i32, %arg1 : i32, i32
  }
  func.func @transform_3(%arg0: i32, %arg1: i32, %arg2: i32) -> (i32, i32) {
    %c0_i32 = arith.constant 0 : i32
    return %arg0, %arg1 : i32, i32
  }
}

module attributes {stable_mosaic.version = 11 : i64} {
  func.func @attn_block_kernel(%arg0: i32, %arg1: i32, %arg2: memref<1xi32, #tpu.memory_space<smem>>, %arg3: memref<1x8x32xbf16, #tpu.memory_space<vmem>>, %arg4: memref<1x8x32xbf16, #tpu.memory_space<vmem>>, %arg5: memref<2x32x16xbf16, #tpu.memory_space<vmem>>, %arg6: memref<2x1x16xf32, #tpu.memory_space<vmem>>, %arg7: memref<2x32x32xbf16, #tpu.memory_space<vmem>>, %arg8: memref<2x1x32xf32, #tpu.memory_space<vmem>>, %arg9: memref<2x16x32xbf16, #tpu.memory_space<vmem>>, %arg10: memref<1x32xf32, #tpu.memory_space<vmem>>, %arg11: memref<1x32xf32, #tpu.memory_space<vmem>>, %arg12: memref<1x32xf32, #tpu.memory_space<vmem>>, %arg13: memref<1x8x32xbf16, #tpu.memory_space<vmem>>, %arg14: memref<2x8x32xbf16, #tpu.memory_space<vmem>>, %arg15: memref<8x32xf32, #tpu.memory_space<vmem>>) attributes {dimension_semantics = [#tpu.dimension_semantics<parallel>, #tpu.dimension_semantics<arbitrary>], iteration_bounds = array<i64: 2, 1>, scalar_prefetch = 1 : i64, scratch_operands = 2 : i64, tpu.core_type = #tpu.core_type<tc>, window_params = [{transform_indices = @transform_0, window_bounds = array<i64: 1, 8, 32>}, {transform_indices = @transform_1, window_bounds = array<i64: 1, 8, 32>}, {pipeline_mode = #tpu.pipeline_mode<synchronous>, transform_indices = @transform_2, window_bounds = array<i64: 2, 32, 16>}, {pipeline_mode = #tpu.pipeline_mode<synchronous>, transform_indices = @transform_3, window_bounds = array<i64: 2, 1, 16>}, {pipeline_mode = #tpu.pipeline_mode<synchronous>, transform_indices = @transform_4, window_bounds = array<i64: 2, 32, 32>}, {pipeline_mode = #tpu.pipeline_mode<synchronous>, transform_indices = @transform_5, window_bounds = array<i64: 2, 1, 32>}, {pipeline_mode = #tpu.pipeline_mode<synchronous>, transform_indices = @transform_6, window_bounds = array<i64: 2, 16, 32>}, {pipeline_mode = #tpu.pipeline_mode<synchronous>, transform_indices = @transform_7, window_bounds = array<i64: 1, 32>}, {pipeline_mode = #tpu.pipeline_mode<synchronous>, transform_indices = @transform_8, window_bounds = array<i64: 1, 32>}, {pipeline_mode = #tpu.pipeline_mode<synchronous>, transform_indices = @transform_9, window_bounds = array<i64: 1, 32>}, {transform_indices = @transform_10, window_bounds = array<i64: 1, 8, 32>}]} {
    %c0_i32 = arith.constant 0 : i32
    %0 = arith.cmpi eq, %arg1, %c0_i32 : i32
    %1 = arith.extui %0 : i1 to i32
    %c0_i32_0 = arith.constant 0 : i32
    %2 = arith.cmpi ne, %1, %c0_i32_0 : i32
    scf.if %2 {
      %c0_24 = arith.constant 0 : index
      %c0_25 = arith.constant 0 : index
      %c0_26 = arith.constant 0 : index
      %52 = vector.load %arg3[%c0_24, %c0_25, %c0_26] : memref<1x8x32xbf16, #tpu.memory_space<vmem>>, vector<1x8x32xbf16>
      %53 = vector.shape_cast %52 : vector<1x8x32xbf16> to vector<8x32xbf16>
      %c0_i32_27 = arith.constant 0 : i32
      %c2_i32_28 = arith.constant 2 : i32
      %54 = arith.addi %c0_i32_27, %c2_i32_28 : i32
      %c1_i32_29 = arith.constant 1 : i32
      scf.for %arg16 = %c0_i32_27 to %54 step %c1_i32_29  : i32 {
        %c1_i32_31 = arith.constant 1 : i32
        %55 = arith.muli %arg16, %c1_i32_31 : i32
        %c0_i32_32 = arith.constant 0 : i32
        %56 = arith.addi %c0_i32_32, %55 : i32
        %57 = arith.index_cast %56 : i32 to index
        %c0_33 = arith.constant 0 : index
        %c0_34 = arith.constant 0 : index
        %58 = vector.load %arg7[%57, %c0_33, %c0_34] : memref<2x32x32xbf16, #tpu.memory_space<vmem>>, vector<1x32x32xbf16>
        %59 = vector.shape_cast %58 : vector<1x32x32xbf16> to vector<32x32xbf16>
        %cst_35 = arith.constant dense<0.000000e+00> : vector<8x32xf32>
        %60 = tpu.matmul %53, %59, %cst_35 {dimension_numbers = #tpu.dot_dimension_numbers<[1], [0], [0], [1], [0, 0, 1, 1], [], []>} : vector<8x32xbf16>, vector<32x32xbf16>, vector<8x32xf32> -> vector<8x32xf32>
        %61 = arith.index_cast %56 : i32 to index
        %c0_36 = arith.constant 0 : index
        %c0_37 = arith.constant 0 : index
        %62 = vector.load %arg8[%61, %c0_36, %c0_37] : memref<2x1x32xf32, #tpu.memory_space<vmem>>, vector<1x1x32xf32>
        %63 = vector.shape_cast %62 : vector<1x1x32xf32> to vector<1x32xf32>
        %64 = vector.broadcast %63 : vector<1x32xf32> to vector<8x32xf32>
        %65 = arith.addf %60, %64 : vector<8x32xf32>
        %66 = arith.truncf %65 : vector<8x32xf32> to vector<8x32xbf16>
        %67 = arith.index_cast %56 : i32 to index
        %c0_38 = arith.constant 0 : index
        %c0_39 = arith.constant 0 : index
        %68 = vector.load %arg14[%67, %c0_38, %c0_39] : memref<2x8x32xbf16, #tpu.memory_space<vmem>>, vector<1x8x32xbf16>
        %69 = vector.shape_cast %68 : vector<1x8x32xbf16> to vector<8x32xbf16>
        %70 = vector.shape_cast %66 : vector<8x32xbf16> to vector<1x8x32xbf16>
        tpu.vector_store %arg14[%67, %c0_38, %c0_39], %70 {strides = array<i32>} : memref<2x8x32xbf16, #tpu.memory_space<vmem>>, vector<1x8x32xbf16>,
      }
      %c2_i32_30 = arith.constant 2 : i32
    } else {
    }
    %c0 = arith.constant 0 : index
    %c0_1 = arith.constant 0 : index
    %c0_2 = arith.constant 0 : index
    %3 = vector.load %arg4[%c0, %c0_1, %c0_2] : memref<1x8x32xbf16, #tpu.memory_space<vmem>>, vector<1x8x32xbf16>
    %4 = vector.shape_cast %3 : vector<1x8x32xbf16> to vector<8x32xbf16>
    %c8_i32 = arith.constant 8 : i32
    %5 = arith.muli %arg1, %c8_i32 : i32
    %6 = tpu.iota {dimensions = array<i32: 0>} : vector<8x8xi32>
    %7 = vector.broadcast %5 : i32 to vector<8x8xi32>
    %8 = arith.addi %7, %6 : vector<8x8xi32>
    %9 = tpu.iota {dimensions = array<i32: 1>} : vector<8x8xi32>
    %10 = arith.cmpi sle, %9, %8 : vector<8x8xi32>
    %c0_3 = arith.constant 0 : index
    %11 = memref.load %arg2[%c0_3] : memref<1xi32, #tpu.memory_space<smem>>
    %12 = vector.broadcast %11 : i32 to vector<8x8xi32>
    %13 = arith.cmpi slt, %9, %12 : vector<8x8xi32>
    %14 = arith.ori %10, %13 : vector<8x8xi1>
    %cst = arith.constant 0.000000e+00 : f32
    %15 = vector.broadcast %cst : f32 to vector<8x32xf32>
    %c0_4 = arith.constant 0 : index
    %c0_5 = arith.constant 0 : index
    %16 = vector.load %arg15[%c0_4, %c0_5] : memref<8x32xf32, #tpu.memory_space<vmem>>, vector<8x32xf32>
    tpu.vector_store %arg15[%c0_4, %c0_5], %15 {strides = array<i32>} : memref<8x32xf32, #tpu.memory_space<vmem>>, vector<8x32xf32>,
    %c0_i32_6 = arith.constant 0 : i32
    %c2_i32 = arith.constant 2 : i32
    %17 = arith.addi %c0_i32_6, %c2_i32 : i32
    %c1_i32 = arith.constant 1 : i32
    scf.for %arg16 = %c0_i32_6 to %17 step %c1_i32  : i32 {
      %c1_i32_24 = arith.constant 1 : i32
      %52 = arith.muli %arg16, %c1_i32_24 : i32
      %c0_i32_25 = arith.constant 0 : i32
      %53 = arith.addi %c0_i32_25, %52 : i32
      %54 = arith.index_cast %53 : i32 to index
      %c0_26 = arith.constant 0 : index
      %c0_27 = arith.constant 0 : index
      %55 = vector.load %arg5[%54, %c0_26, %c0_27] : memref<2x32x16xbf16, #tpu.memory_space<vmem>>, vector<1x32x16xbf16>
      %56 = vector.shape_cast %55 : vector<1x32x16xbf16> to vector<32x16xbf16>
      %cst_28 = arith.constant dense<0.000000e+00> : vector<8x16xf32>
      %57 = tpu.matmul %4, %56, %cst_28 {dimension_numbers = #tpu.dot_dimension_numbers<[1], [0], [0], [1], [0, 0, 1, 1], [], []>} : vector<8x32xbf16>, vector<32x16xbf16>, vector<8x16xf32> -> vector<8x16xf32>
      %58 = arith.index_cast %53 : i32 to index
      %c0_29 = arith.constant 0 : index
      %c0_30 = arith.constant 0 : index
      %59 = vector.load %arg6[%58, %c0_29, %c0_30] : memref<2x1x16xf32, #tpu.memory_space<vmem>>, vector<1x1x16xf32>
      %60 = vector.shape_cast %59 : vector<1x1x16xf32> to vector<1x16xf32>
      %61 = vector.broadcast %60 : vector<1x16xf32> to vector<8x16xf32>
      %62 = arith.addf %57, %61 : vector<8x16xf32>
      %63 = arith.index_cast %53 : i32 to index
      %c0_31 = arith.constant 0 : index
      %c0_32 = arith.constant 0 : index
      %64 = vector.load %arg14[%63, %c0_31, %c0_32] : memref<2x8x32xbf16, #tpu.memory_space<vmem>>, vector<1x8x32xbf16>
      %65 = vector.shape_cast %64 : vector<1x8x32xbf16> to vector<8x32xbf16>
      %66 = vector.extract_strided_slice %65 {offsets = [0, 0], sizes = [8, 16], strides = [1, 1]} : vector<8x32xbf16> to vector<8x16xbf16>
      %67 = vector.extract_strided_slice %65 {offsets = [0, 16], sizes = [8, 16], strides = [1, 1]} : vector<8x32xbf16> to vector<8x16xbf16>
      %cst_33 = arith.constant 2.500000e-01 : f32
      %68 = vector.broadcast %cst_33 : f32 to vector<8x16xf32>
      %69 = arith.mulf %62, %68 : vector<8x16xf32>
      %70 = arith.truncf %69 : vector<8x16xf32> to vector<8x16xbf16>
      %cst_34 = arith.constant dense<0.000000e+00> : vector<8x8xf32>
      %71 = tpu.matmul %70, %66, %cst_34 {dimension_numbers = #tpu.dot_dimension_numbers<[1], [1], [0], [0], [0, 0, 1, 0], [], []>} : vector<8x16xbf16>, vector<8x16xbf16>, vector<8x8xf32> -> vector<8x8xf32>
      %cst_35 = arith.constant 0xFF800000 : f32
      %72 = vector.broadcast %cst_35 : f32 to vector<8x8xf32>
      %73 = arith.select %14, %71, %72 : vector<8x8xi1>, vector<8x8xf32>
      %cst_36 = arith.constant dense<0xFF800000> : vector<8xf32>
      %74 = vector.multi_reduction <maximumf>, %73, %cst_36 [1] : vector<8x8xf32> to vector<8xf32>
      %75 = vector.shape_cast %74 : vector<8xf32> to vector<8x1xf32>
      %76 = vector.broadcast %75 : vector<8x1xf32> to vector<8x8xf32>
      %77 = arith.subf %73, %76 : vector<8x8xf32>
      %78 = math.exp %77 : vector<8x8xf32>
      %cst_37 = arith.constant dense<0.000000e+00> : vector<8xf32>
      %79 = vector.multi_reduction <add>, %78, %cst_37 [1] : vector<8x8xf32> to vector<8xf32>
      %80 = vector.shape_cast %79 : vector<8xf32> to vector<8x1xf32>
      %81 = tpu.reciprocal %80 {approx = true} : vector<8x1xf32> -> vector<8x1xf32>
      %82 = vector.broadcast %81 : vector<8x1xf32> to vector<8x8xf32>
      %83 = arith.mulf %78, %82 : vector<8x8xf32>
      %84 = arith.truncf %83 : vector<8x8xf32> to vector<8x8xbf16>
      %cst_38 = arith.constant dense<0.000000e+00> : vector<8x16xf32>
      %85 = tpu.matmul %84, %67, %cst_38 {dimension_numbers = #tpu.dot_dimension_numbers<[1], [0], [0], [1], [0, 0, 1, 1], [], []>} : vector<8x8xbf16>, vector<8x16xbf16>, vector<8x16xf32> -> vector<8x16xf32>
      %c0_39 = arith.constant 0 : index
      %c0_40 = arith.constant 0 : index
      %86 = vector.load %arg15[%c0_39, %c0_40] : memref<8x32xf32, #tpu.memory_space<vmem>>, vector<8x32xf32>
      %87 = arith.truncf %85 : vector<8x16xf32> to vector<8x16xbf16>
      %88 = arith.index_cast %53 : i32 to index
      %c0_41 = arith.constant 0 : index
      %c0_42 = arith.constant 0 : index
      %89 = vector.load %arg9[%88, %c0_41, %c0_42] : memref<2x16x32xbf16, #tpu.memory_space<vmem>>, vector<1x16x32xbf16>
      %90 = vector.shape_cast %89 : vector<1x16x32xbf16> to vector<16x32xbf16>
      %cst_43 = arith.constant dense<0.000000e+00> : vector<8x32xf32>
      %91 = tpu.matmul %87, %90, %cst_43 {dimension_numbers = #tpu.dot_dimension_numbers<[1], [0], [0], [1], [0, 0, 1, 1], [], []>} : vector<8x16xbf16>, vector<16x32xbf16>, vector<8x32xf32> -> vector<8x32xf32>
      %92 = arith.addf %86, %91 : vector<8x32xf32>
      %c0_44 = arith.constant 0 : index
      %c0_45 = arith.constant 0 : index
      %93 = vector.load %arg15[%c0_44, %c0_45] : memref<8x32xf32, #tpu.memory_space<vmem>>, vector<8x32xf32>
      tpu.vector_store %arg15[%c0_44, %c0_45], %92 {strides = array<i32>} : memref<8x32xf32, #tpu.memory_space<vmem>>, vector<8x32xf32>,
    }
    %c2_i32_7 = arith.constant 2 : i32
    %c0_8 = arith.constant 0 : index
    %c0_9 = arith.constant 0 : index
    %18 = vector.load %arg15[%c0_8, %c0_9] : memref<8x32xf32, #tpu.memory_space<vmem>>, vector<8x32xf32>
    %c0_10 = arith.constant 0 : index
    %c0_11 = arith.constant 0 : index
    %19 = vector.load %arg10[%c0_10, %c0_11] : memref<1x32xf32, #tpu.memory_space<vmem>>, vector<1x32xf32>
    %20 = vector.broadcast %19 : vector<1x32xf32> to vector<8x32xf32>
    %21 = arith.addf %18, %20 : vector<8x32xf32>
    %22 = arith.extf %4 : vector<8x32xbf16> to vector<8x32xf32>
    %23 = arith.addf %22, %21 : vector<8x32xf32>
    %c0_12 = arith.constant 0 : index
    %c0_13 = arith.constant 0 : index
    %24 = vector.load %arg11[%c0_12, %c0_13] : memref<1x32xf32, #tpu.memory_space<vmem>>, vector<1x32xf32>
    %c0_14 = arith.constant 0 : index
    %c0_15 = arith.constant 0 : index
    %25 = vector.load %arg12[%c0_14, %c0_15] : memref<1x32xf32, #tpu.memory_space<vmem>>, vector<1x32xf32>
    %cst_16 = arith.constant dense<0.000000e+00> : vector<8xf32>
    %26 = vector.multi_reduction <add>, %23, %cst_16 [1] : vector<8x32xf32> to vector<8xf32>
    %27 = vector.shape_cast %26 : vector<8xf32> to vector<8x1xf32>
    %cst_17 = arith.constant 3.200000e+01 : f32
    %28 = vector.broadcast %cst_17 : f32 to vector<8x1xf32>
    %29 = arith.divf %27, %28 : vector<8x1xf32>
    %30 = vector.broadcast %29 : vector<8x1xf32> to vector<8x32xf32>
    %31 = arith.subf %23, %30 : vector<8x32xf32>
    %32 = arith.mulf %31, %31 : vector<8x32xf32>
    %cst_18 = arith.constant dense<0.000000e+00> : vector<8xf32>
    %33 = vector.multi_reduction <add>, %32, %cst_18 [1] : vector<8x32xf32> to vector<8xf32>
    %34 = vector.shape_cast %33 : vector<8xf32> to vector<8x1xf32>
    %cst_19 = arith.constant 3.200000e+01 : f32
    %35 = vector.broadcast %cst_19 : f32 to vector<8x1xf32>
    %36 = arith.divf %34, %35 : vector<8x1xf32>
    %37 = vector.broadcast %29 : vector<8x1xf32> to vector<8x32xf32>
    %38 = arith.subf %23, %37 : vector<8x32xf32>
    %cst_20 = arith.constant 9.99999974E-6 : f32
    %39 = vector.broadcast %cst_20 : f32 to vector<8x1xf32>
    %40 = arith.addf %36, %39 : vector<8x1xf32>
    %41 = math.rsqrt %40 : vector<8x1xf32>
    %42 = vector.broadcast %41 : vector<8x1xf32> to vector<8x32xf32>
    %43 = arith.mulf %38, %42 : vector<8x32xf32>
    %44 = vector.broadcast %24 : vector<1x32xf32> to vector<8x32xf32>
    %45 = arith.mulf %43, %44 : vector<8x32xf32>
    %46 = vector.broadcast %25 : vector<1x32xf32> to vector<8x32xf32>
    %47 = arith.addf %45, %46 : vector<8x32xf32>
    %48 = arith.truncf %47 : vector<8x32xf32> to vector<8x32xbf16>
    %c0_21 = arith.constant 0 : index
    %c0_22 = arith.constant 0 : index
    %c0_23 = arith.constant 0 : index
    %49 = vector.load %arg13[%c0_21, %c0_22, %c0_23] : memref<1x8x32xbf16, #tpu.memory_space<vmem>>, vector<1x8x32xbf16>
    %50 = vector.shape_cast %49 : vector<1x8x32xbf16> to vector<8x32xbf16>
    %51 = vector.shape_cast %48 : vector<8x32xbf16> to vector<1x8x32xbf16>
    tpu.vector_store %arg13[%c0_21, %c0_22, %c0_23], %51 {strides = array<i32>} : memref<1x8x32xbf16, #tpu.memory_space<vmem>>, vector<1x8x32xbf16>,
    return
  }
  func.func @transform_0(%arg0: i32, %arg1: i32, %arg2: memref<1xi32, #tpu.memory_space<smem>>) -> (i32, i32, i32) {
    %c0_i32 = arith.constant 0 : i32
    %c0_i32_0 = arith.constant 0 : i32
    %c0_i32_1 = arith.constant 0 : i32
    return %arg0, %c0_i32, %c0_i32_0 : i32, i32, i32
  }
  func.func @transform_1(%arg0: i32, %arg1: i32, %arg2: memref<1xi32, #tpu.memory_space<smem>>) -> (i32, i32, i32) {
    %c0_i32 = arith.constant 0 : i32
    %c0_i32_0 = arith.constant 0 : i32
    return %arg0, %arg1, %c0_i32 : i32, i32, i32
  }
  func.func @transform_2(%arg0: i32, %arg1: i32, %arg2: memref<1xi32, #tpu.memory_space<smem>>) -> (i32, i32, i32) {
    %c0_i32 = arith.constant 0 : i32
    %c0_i32_0 = arith.constant 0 : i32
    %c0_i32_1 = arith.constant 0 : i32
    %c0_i32_2 = arith.constant 0 : i32
    return %c0_i32, %c0_i32_0, %c0_i32_1 : i32, i32, i32
  }
  func.func @transform_3(%arg0: i32, %arg1: i32, %arg2: memref<1xi32, #tpu.memory_space<smem>>) -> (i32, i32, i32) {
    %c0_i32 = arith.constant 0 : i32
    %c0_i32_0 = arith.constant 0 : i32
    %c0_i32_1 = arith.constant 0 : i32
    %c0_i32_2 = arith.constant 0 : i32
    return %c0_i32, %c0_i32_0, %c0_i32_1 : i32, i32, i32
  }
  func.func @transform_4(%arg0: i32, %arg1: i32, %arg2: memref<1xi32, #tpu.memory_space<smem>>) -> (i32, i32, i32) {
    %c0_i32 = arith.constant 0 : i32
    %c0_i32_0 = arith.constant 0 : i32
    %c0_i32_1 = arith.constant 0 : i32
    %c0_i32_2 = arith.constant 0 : i32
    return %c0_i32, %c0_i32_0, %c0_i32_1 : i32, i32, i32
  }
  func.func @transform_5(%arg0: i32, %arg1: i32, %arg2: memref<1xi32, #tpu.memory_space<smem>>) -> (i32, i32, i32) {
    %c0_i32 = arith.constant 0 : i32
    %c0_i32_0 = arith.constant 0 : i32
    %c0_i32_1 = arith.constant 0 : i32
    %c0_i32_2 = arith.constant 0 : i32
    return %c0_i32, %c0_i32_0, %c0_i32_1 : i32, i32, i32
  }
  func.func @transform_6(%arg0: i32, %arg1: i32, %arg2: memref<1xi32, #tpu.memory_space<smem>>) -> (i32, i32, i32) {
    %c0_i32 = arith.constant 0 : i32
    %c0_i32_0 = arith.constant 0 : i32
    %c0_i32_1 = arith.constant 0 : i32
    %c0_i32_2 = arith.constant 0 : i32
    return %c0_i32, %c0_i32_0, %c0_i32_1 : i32, i32, i32
  }
  func.func @transform_7(%arg0: i32, %arg1: i32, %arg2: memref<1xi32, #tpu.memory_space<smem>>) -> (i32, i32) {
    %c0_i32 = arith.constant 0 : i32
    %c0_i32_0 = arith.constant 0 : i32
    %c0_i32_1 = arith.constant 0 : i32
    return %c0_i32, %c0_i32_0 : i32, i32
  }
  func.func @transform_8(%arg0: i32, %arg1: i32, %arg2: memref<1xi32, #tpu.memory_space<smem>>) -> (i32, i32) {
    %c0_i32 = arith.constant 0 : i32
    %c0_i32_0 = arith.constant 0 : i32
    %c0_i32_1 = arith.constant 0 : i32
    return %c0_i32, %c0_i32_0 : i32, i32
  }
  func.func @transform_9(%arg0: i32, %arg1: i32, %arg2: memref<1xi32, #tpu.memory_space<smem>>) -> (i32, i32) {
    %c0_i32 = arith.constant 0 : i32
    %c0_i32_0 = arith.constant 0 : i32
    %c0_i32_1 = arith.constant 0 : i32
    return %c0_i32, %c0_i32_0 : i32, i32
  }
  func.func @transform_10(%arg0: i32, %arg1: i32, %arg2: memref<1xi32, #tpu.memory_space<smem>>) -> (i32, i32, i32) {
    %c0_i32 = arith.constant 0 : i32
    %c0_i32_0 = arith.constant 0 : i32
    return %arg0, %arg1, %c0_i32 : i32, i32, i32
  }
}

module attributes {stable_mosaic.version = 11 : i64} {
  func.func @ffn_block_kernel(%arg0: i32, %arg1: i32, %arg2: memref<1x8x32xbf16, #tpu.memory_space<vmem>>, %arg3: memref<32x32xbf16, #tpu.memory_space<vmem>>, %arg4: memref<1x32xf32, #tpu.memory_space<vmem>>, %arg5: memref<32x32xbf16, #tpu.memory_space<vmem>>, %arg6: memref<1x32xf32, #tpu.memory_space<vmem>>, %arg7: memref<1x32xf32, #tpu.memory_space<vmem>>, %arg8: memref<1x32xf32, #tpu.memory_space<vmem>>, %arg9: memref<1x8x32xbf16, #tpu.memory_space<vmem>>) attributes {dimension_semantics = [#tpu.dimension_semantics<parallel>, #tpu.dimension_semantics<parallel>], iteration_bounds = array<i64: 2, 1>, scalar_prefetch = 0 : i64, scratch_operands = 0 : i64, tpu.core_type = #tpu.core_type<tc>, window_params = [{transform_indices = @transform_0, window_bounds = array<i64: 1, 8, 32>}, {pipeline_mode = #tpu.pipeline_mode<synchronous>, transform_indices = @transform_1, window_bounds = array<i64: 32, 32>}, {pipeline_mode = #tpu.pipeline_mode<synchronous>, transform_indices = @transform_2, window_bounds = array<i64: 1, 32>}, {pipeline_mode = #tpu.pipeline_mode<synchronous>, transform_indices = @transform_3, window_bounds = array<i64: 32, 32>}, {pipeline_mode = #tpu.pipeline_mode<synchronous>, transform_indices = @transform_4, window_bounds = array<i64: 1, 32>}, {pipeline_mode = #tpu.pipeline_mode<synchronous>, transform_indices = @transform_5, window_bounds = array<i64: 1, 32>}, {pipeline_mode = #tpu.pipeline_mode<synchronous>, transform_indices = @transform_6, window_bounds = array<i64: 1, 32>}, {transform_indices = @transform_7, window_bounds = array<i64: 1, 8, 32>}]} {
    %c0 = arith.constant 0 : index
    %c0_0 = arith.constant 0 : index
    %c0_1 = arith.constant 0 : index
    %0 = vector.load %arg2[%c0, %c0_0, %c0_1] : memref<1x8x32xbf16, #tpu.memory_space<vmem>>, vector<1x8x32xbf16>
    %1 = vector.shape_cast %0 : vector<1x8x32xbf16> to vector<8x32xbf16>
    %c0_2 = arith.constant 0 : index
    %c0_3 = arith.constant 0 : index
    %2 = vector.load %arg3[%c0_2, %c0_3] : memref<32x32xbf16, #tpu.memory_space<vmem>>, vector<32x32xbf16>
    %cst = arith.constant dense<0.000000e+00> : vector<8x32xf32>
    %3 = tpu.matmul %1, %2, %cst {dimension_numbers = #tpu.dot_dimension_numbers<[1], [0], [0], [1], [0, 0, 1, 1], [], []>} : vector<8x32xbf16>, vector<32x32xbf16>, vector<8x32xf32> -> vector<8x32xf32>
    %c0_4 = arith.constant 0 : index
    %c0_5 = arith.constant 0 : index
    %4 = vector.load %arg4[%c0_4, %c0_5] : memref<1x32xf32, #tpu.memory_space<vmem>>, vector<1x32xf32>
    %5 = vector.broadcast %4 : vector<1x32xf32> to vector<8x32xf32>
    %6 = arith.addf %3, %5 : vector<8x32xf32>
    %cst_6 = arith.constant 0.000000e+00 : f32
    %7 = vector.broadcast %cst_6 : f32 to vector<8x32xf32>
    %8 = arith.maximumf %6, %7 : vector<8x32xf32>
    %9 = arith.truncf %8 : vector<8x32xf32> to vector<8x32xbf16>
    %c0_7 = arith.constant 0 : index
    %c0_8 = arith.constant 0 : index
    %10 = vector.load %arg5[%c0_7, %c0_8] : memref<32x32xbf16, #tpu.memory_space<vmem>>, vector<32x32xbf16>
    %cst_9 = arith.constant dense<0.000000e+00> : vector<8x32xf32>
    %11 = tpu.matmul %9, %10, %cst_9 {dimension_numbers = #tpu.dot_dimension_numbers<[1], [0], [0], [1], [0, 0, 1, 1], [], []>} : vector<8x32xbf16>, vector<32x32xbf16>, vector<8x32xf32> -> vector<8x32xf32>
    %c0_10 = arith.constant 0 : index
    %c0_11 = arith.constant 0 : index
    %12 = vector.load %arg6[%c0_10, %c0_11] : memref<1x32xf32, #tpu.memory_space<vmem>>, vector<1x32xf32>
    %13 = vector.broadcast %12 : vector<1x32xf32> to vector<8x32xf32>
    %14 = arith.addf %11, %13 : vector<8x32xf32>
    %15 = arith.extf %1 : vector<8x32xbf16> to vector<8x32xf32>
    %16 = arith.addf %15, %14 : vector<8x32xf32>
    %c0_12 = arith.constant 0 : index
    %c0_13 = arith.constant 0 : index
    %17 = vector.load %arg7[%c0_12, %c0_13] : memref<1x32xf32, #tpu.memory_space<vmem>>, vector<1x32xf32>
    %c0_14 = arith.constant 0 : index
    %c0_15 = arith.constant 0 : index
    %18 = vector.load %arg8[%c0_14, %c0_15] : memref<1x32xf32, #tpu.memory_space<vmem>>, vector<1x32xf32>
    %cst_16 = arith.constant dense<0.000000e+00> : vector<8xf32>
    %19 = vector.multi_reduction <add>, %16, %cst_16 [1] : vector<8x32xf32> to vector<8xf32>
    %20 = vector.shape_cast %19 : vector<8xf32> to vector<8x1xf32>
    %cst_17 = arith.constant 3.200000e+01 : f32
    %21 = vector.broadcast %cst_17 : f32 to vector<8x1xf32>
    %22 = arith.divf %20, %21 : vector<8x1xf32>
    %23 = vector.broadcast %22 : vector<8x1xf32> to vector<8x32xf32>
    %24 = arith.subf %16, %23 : vector<8x32xf32>
    %25 = arith.mulf %24, %24 : vector<8x32xf32>
    %cst_18 = arith.constant dense<0.000000e+00> : vector<8xf32>
    %26 = vector.multi_reduction <add>, %25, %cst_18 [1] : vector<8x32xf32> to vector<8xf32>
    %27 = vector.shape_cast %26 : vector<8xf32> to vector<8x1xf32>
    %cst_19 = arith.constant 3.200000e+01 : f32
    %28 = vector.broadcast %cst_19 : f32 to vector<8x1xf32>
    %29 = arith.divf %27, %28 : vector<8x1xf32>
    %30 = vector.broadcast %22 : vector<8x1xf32> to vector<8x32xf32>
    %31 = arith.subf %16, %30 : vector<8x32xf32>
    %cst_20 = arith.constant 9.99999974E-6 : f32
    %32 = vector.broadcast %cst_20 : f32 to vector<8x1xf32>
    %33 = arith.addf %29, %32 : vector<8x1xf32>
    %34 = math.rsqrt %33 : vector<8x1xf32>
    %35 = vector.broadcast %34 : vector<8x1xf32> to vector<8x32xf32>
    %36 = arith.mulf %31, %35 : vector<8x32xf32>
    %37 = vector.broadcast %17 : vector<1x32xf32> to vector<8x32xf32>
    %38 = arith.mulf %36, %37 : vector<8x32xf32>
    %39 = vector.broadcast %18 : vector<1x32xf32> to vector<8x32xf32>
    %40 = arith.addf %38, %39 : vector<8x32xf32>
    %41 = arith.truncf %40 : vector<8x32xf32> to vector<8x32xbf16>
    %c0_21 = arith.constant 0 : index
    %c0_22 = arith.constant 0 : index
    %c0_23 = arith.constant 0 : index
    %42 = vector.load %arg9[%c0_21, %c0_22, %c0_23] : memref<1x8x32xbf16, #tpu.memory_space<vmem>>, vector<1x8x32xbf16>
    %43 = vector.shape_cast %42 : vector<1x8x32xbf16> to vector<8x32xbf16>
    %44 = vector.shape_cast %41 : vector<8x32xbf16> to vector<1x8x32xbf16>
    tpu.vector_store %arg9[%c0_21, %c0_22, %c0_23], %44 {strides = array<i32>} : memref<1x8x32xbf16, #tpu.memory_space<vmem>>, vector<1x8x32xbf16>,
    return
  }
  func.func @transform_0(%arg0: i32, %arg1: i32) -> (i32, i32, i32) {
    %c0_i32 = arith.constant 0 : i32
    %c0_i32_0 = arith.constant 0 : i32
    return %arg0, %arg1, %c0_i32 : i32, i32, i32
  }
  func.func @transform_1(%arg0: i32, %arg1: i32) -> (i32, i32) {
    %c0_i32 = arith.constant 0 : i32
    %c0_i32_0 = arith.constant 0 : i32
    %c0_i32_1 = arith.constant 0 : i32
    return %c0_i32, %c0_i32_0 : i32, i32
  }
  func.func @transform_2(%arg0: i32, %arg1: i32) -> (i32, i32) {
    %c0_i32 = arith.constant 0 : i32
    %c0_i32_0 = arith.constant 0 : i32
    %c0_i32_1 = arith.constant 0 : i32
    return %c0_i32, %c0_i32_0 : i32, i32
  }
  func.func @transform_3(%arg0: i32, %arg1: i32) -> (i32, i32) {
    %c0_i32 = arith.constant 0 : i32
    %c0_i32_0 = arith.constant 0 : i32
    %c0_i32_1 = arith.constant 0 : i32
    return %c0_i32, %c0_i32_0 : i32, i32
  }
  func.func @transform_4(%arg0: i32, %arg1: i32) -> (i32, i32) {
    %c0_i32 = arith.constant 0 : i32
    %c0_i32_0 = arith.constant 0 : i32
    %c0_i32_1 = arith.constant 0 : i32
    return %c0_i32, %c0_i32_0 : i32, i32
  }
  func.func @transform_5(%arg0: i32, %arg1: i32) -> (i32, i32) {
    %c0_i32 = arith.constant 0 : i32
    %c0_i32_0 = arith.constant 0 : i32
    %c0_i32_1 = arith.constant 0 : i32
    return %c0_i32, %c0_i32_0 : i32, i32
  }
  func.func @transform_6(%arg0: i32, %arg1: i32) -> (i32, i32) {
    %c0_i32 = arith.constant 0 : i32
    %c0_i32_0 = arith.constant 0 : i32
    %c0_i32_1 = arith.constant 0 : i32
    return %c0_i32, %c0_i32_0 : i32, i32
  }
  func.func @transform_7(%arg0: i32, %arg1: i32) -> (i32, i32, i32) {
    %c0_i32 = arith.constant 0 : i32
    %c0_i32_0 = arith.constant 0 : i32
    return %arg0, %arg1, %c0_i32 : i32, i32, i32
  }
}

module attributes {stable_mosaic.version = 11 : i64} {
  func.func @matmul_kernel(%arg0: i32, %arg1: i32, %arg2: i32, %arg3: memref<128x128xbf16, #tpu.memory_space<vmem>>, %arg4: memref<128x128xbf16, #tpu.memory_space<vmem>>, %arg5: memref<1x128xf32, #tpu.memory_space<vmem>>, %arg6: memref<128x128xf32, #tpu.memory_space<vmem>>, %arg7: memref<128x128xf32, #tpu.memory_space<vmem>>) attributes {dimension_semantics = [#tpu.dimension_semantics<parallel>, #tpu.dimension_semantics<parallel>, #tpu.dimension_semantics<arbitrary>], iteration_bounds = array<i64: 1, 1, 1>, scalar_prefetch = 0 : i64, scratch_operands = 1 : i64, tpu.core_type = #tpu.core_type<tc>, window_params = [{transform_indices = @transform_0, window_bounds = array<i64: 128, 128>}, {transform_indices = @transform_1, window_bounds = array<i64: 128, 128>}, {transform_indices = @transform_2, window_bounds = array<i64: 1, 128>}, {transform_indices = @transform_3, window_bounds = array<i64: 128, 128>}]} {
    %c0_i32 = arith.constant 0 : i32
    %0 = arith.cmpi eq, %arg2, %c0_i32 : i32
    %1 = arith.extui %0 : i1 to i32
    %c0_i32_0 = arith.constant 0 : i32
    %2 = arith.cmpi ne, %1, %c0_i32_0 : i32
    scf.if %2 {
      %cst_10 = arith.constant 0.000000e+00 : f32
      %12 = vector.broadcast %cst_10 : f32 to vector<128x128xf32>
      %c0_11 = arith.constant 0 : index
      %c0_12 = arith.constant 0 : index
      %13 = vector.load %arg7[%c0_11, %c0_12] : memref<128x128xf32, #tpu.memory_space<vmem>>, vector<128x128xf32>
      tpu.vector_store %arg7[%c0_11, %c0_12], %12 {strides = array<i32>} : memref<128x128xf32, #tpu.memory_space<vmem>>, vector<128x128xf32>,
    } else {
    }
    %c0 = arith.constant 0 : index
    %c0_1 = arith.constant 0 : index
    %3 = vector.load %arg7[%c0, %c0_1] : memref<128x128xf32, #tpu.memory_space<vmem>>, vector<128x128xf32>
    %c0_2 = arith.constant 0 : index
    %c0_3 = arith.constant 0 : index
    %4 = vector.load %arg3[%c0_2, %c0_3] : memref<128x128xbf16, #tpu.memory_space<vmem>>, vector<128x128xbf16>
    %c0_4 = arith.constant 0 : index
    %c0_5 = arith.constant 0 : index
    %5 = vector.load %arg4[%c0_4, %c0_5] : memref<128x128xbf16, #tpu.memory_space<vmem>>, vector<128x128xbf16>
    %cst = arith.constant dense<0.000000e+00> : vector<128x128xf32>
    %6 = tpu.matmul %4, %5, %cst {dimension_numbers = #tpu.dot_dimension_numbers<[1], [0], [0], [1], [0, 0, 1, 1], [], []>} : vector<128x128xbf16>, vector<128x128xbf16>, vector<128x128xf32> -> vector<128x128xf32>
    %7 = arith.addf %3, %6 : vector<128x128xf32>
    %c0_6 = arith.constant 0 : index
    %c0_7 = arith.constant 0 : index
    %8 = vector.load %arg7[%c0_6, %c0_7] : memref<128x128xf32, #tpu.memory_space<vmem>>, vector<128x128xf32>
    tpu.vector_store %arg7[%c0_6, %c0_7], %7 {strides = array<i32>} : memref<128x128xf32, #tpu.memory_space<vmem>>, vector<128x128xf32>,
    %c0_i32_8 = arith.constant 0 : i32
    %9 = arith.cmpi eq, %arg2, %c0_i32_8 : i32
    %10 = arith.extui %9 : i1 to i32
    %c0_i32_9 = arith.constant 0 : i32
    %11 = arith.cmpi ne, %10, %c0_i32_9 : i32
    scf.if %11 {
      %c0_10 = arith.constant 0 : index
      %c0_11 = arith.constant 0 : index
      %12 = vector.load %arg7[%c0_10, %c0_11] : memref<128x128xf32, #tpu.memory_space<vmem>>, vector<128x128xf32>
      %c0_12 = arith.constant 0 : index
      %c0_13 = arith.constant 0 : index
      %13 = vector.load %arg5[%c0_12, %c0_13] : memref<1x128xf32, #tpu.memory_space<vmem>>, vector<1x128xf32>
      %14 = vector.broadcast %13 : vector<1x128xf32> to vector<128x128xf32>
      %15 = arith.addf %12, %14 : vector<128x128xf32>
      %c0_14 = arith.constant 0 : index
      %c0_15 = arith.constant 0 : index
      %16 = vector.load %arg6[%c0_14, %c0_15] : memref<128x128xf32, #tpu.memory_space<vmem>>, vector<128x128xf32>
      tpu.vector_store %arg6[%c0_14, %c0_15], %15 {strides = array<i32>} : memref<128x128xf32, #tpu.memory_space<vmem>>, vector<128x128xf32>,
    } else {
    }
    return
  }
  func.func @transform_0(%arg0: i32, %arg1: i32, %arg2: i32) -> (i32, i32) {
    %c0_i32 = arith.constant 0 : i32
    return %arg0, %arg2 : i32, i32
  }
  func.func @transform_1(%arg0: i32, %arg1: i32, %arg2: i32) -> (i32, i32) {
    %c0_i32 = arith.constant 0 : i32
    return %arg2, %arg1 : i32, i32
  }
  func.func @transform_2(%arg0: i32, %arg1: i32, %arg2: i32) -> (i32, i32) {
    %c0_i32 = arith.constant 0 : i32
    %c0_i32_0 = arith.constant 0 : i32
    return %c0_i32, %arg1 : i32, i32
  }
  func.func @transform_3(%arg0: i32, %arg1: i32, %arg2: i32) -> (i32, i32) {
    %c0_i32 = arith.constant 0 : i32
    return %arg0, %arg1 : i32, i32
  }
}

</mosaic_0001>

<llo_original>
// kernel: transformer_causal_forward.8
$region0: #{transformer_causal_forward.8}
  #allocation0 [shape = 'u32[]', space=smem, size = 0x4, offset = 0x4, fixed_abs, tag = 'smem constant byte address 0x4 - core index']
  #allocation1 [shape = 'u32[72,128]{1,0:T(1,128)}', space=vmem, size = 0x9000, scoped, tag = 'internal scratch']
  %s0 = inlined_call_operand.vmem [shape: bf16[2,8,32], index: 0, kind: input, shape index: {}]
  %s1 = inlined_call_operand.vmem [shape: bf16[32,32], index: 1, kind: input, shape index: {}]
  %s2 = inlined_call_operand.vmem [shape: f32[1,32], index: 2, kind: input, shape index: {}]
  %s3 = inlined_call_operand.vmem [shape: bf16[32,32], index: 3, kind: input, shape index: {}]
  %s4 = inlined_call_operand.vmem [shape: f32[1,32], index: 4, kind: input, shape index: {}]
  %s5 = inlined_call_operand.vmem [shape: f32[1,32], index: 5, kind: input, shape index: {}]
  %s6 = inlined_call_operand.vmem [shape: f32[1,32], index: 6, kind: input, shape index: {}]
  %s7 = inlined_call_operand.vmem [shape: bf16[2,8,32], index: 7, kind: output, shape index: {}]
  %s8 = sld [smem:[#allocation0]]
  $region61: #{transformer_causal_forward.8} parent=0
    _
  %s10 = ssub.s32 1, %s8
  %s11 = scalar_select 0, %s10, %s8
  loop: start=0, step=1, limit=4
  $region2: #{transformer_causal_forward.8} parent=0 // loop_pre_header
    _
  $region3: #{transformer_causal_forward.8} parent=0 // loop_header
    %s13 = sphi 0, %s17
    %p14 = scmp.ge.s32.totalorder %s13, 4
    %s20 = sphi 0, %s32
    %s21 = sphi 0, %s28
    %s22 = sphi 0, %s20
    %s23 = sphi 0, %s21
    %s24 = sphi 0, %s22
    %s25 = sphi 0, %s23
    %s37 = sphi 0, %s39
    %s40 = sphi 0, %s37
    %s41 = sphi 0, %s40
    %s57 = sphi 0, %s41
    %s61 = sphi 0, %s61
    %s63 = sphi 0, %s61
    %s64 = sphi 0, %s63
    %s78 = sphi 0, %s64
    %s82 = sphi 0, %s82
    %s84 = sphi 0, %s82
    %s85 = sphi 0, %s84
    %s99 = sphi 0, %s85
    %s103 = sphi 0, %s103
    %s105 = sphi 0, %s103
    %s106 = sphi 0, %s105
    %s120 = sphi 0, %s106
    %s124 = sphi 0, %s124
    %s126 = sphi 0, %s124
    %s127 = sphi 0, %s126
    %s141 = sphi 0, %s127
    %s145 = sphi 0, %s145
    %s147 = sphi 0, %s145
    %s148 = sphi 0, %s147
    %s162 = sphi 0, %s148
    %s166 = sphi 0, %s166
    %s168 = sphi 0, %s166
    %s169 = sphi 0, %s168
    %s183 = sphi 0, %s169
    %s191 = sphi 0, %s193
    %s194 = sphi 0, %s191
    %s195 = sphi 0, %s194
    %s211 = sphi 0, %s195
  $region4: #{transformer_causal_forward.8} parent=0 // loop_header_branch
    %16 = sbr.rel (%p14) target = $region8
  $region5: #{transformer_causal_forward.8} parent=0 // loop_body
    %s18 = ssub.s32 %s13, 1
    %s19 = ssub.s32 %s13, 2
    %s26 = sadd.s32 1, %s21
    %p27 = scmp.ge.s32.totalorder %s26, 1
    %s28 = scalar_select %p27, 0, %s26
    %s29 = sadd.s32 1, %s20
    %s30 = scalar_select %p27, %s29, %s20
    %p31 = scmp.ge.s32.totalorder %s30, 2
    %s32 = scalar_select %p31, 0, %s30
    %s33 = ssub.s32 %s20, %s32
    %s34 = ssub.s32 %s21, %s28
    %s35 = sor.u32 %s33, %s34
    %p36 = scmp.eq.s32.totalorder %s35, 0
    %s38 = sadd.s32 %s37, 1
    %s39 = scalar_select %p36, %s37, %s38
    %p42 = pneg %p36
    %p43 = scmp.eq.s32.totalorder %s13, 1
    %p44 = por %p42, %p43
    %p45 = scmp.ne.s32.totalorder %s37, %s40
    %p46 = scmp.eq.s32.totalorder %s13, 0
    %p47 = por %p45, %p46
    %p48 = scmp.ne.s32.totalorder %s37, %s40
    %p49 = scmp.eq.s32.totalorder %s18, 1
    %p50 = por %p48, %p49
    %p51 = scmp.ne.s32.totalorder %s40, %s41
    %p52 = scmp.eq.s32.totalorder %s18, 0
    %p53 = por %p51, %p52
    %p54 = scmp.ne.s32.totalorder %s40, %s41
    %p55 = scmp.eq.s32.totalorder %s19, 1
    %p56 = por %p54, %p55
    %p58 = scmp.ne.s32.totalorder %s41, %s57
    %p59 = scmp.eq.s32.totalorder %s19, 0
    %p60 = por %p58, %p59
    %s62 = sadd.s32 %s61, 1
    %p65 = scmp.eq.s32.totalorder %s13, 1
    %p66 = scmp.ne.s32.totalorder %s61, %s63
    %p67 = scmp.eq.s32.totalorder %s13, 0
    %p68 = por %p66, %p67
    %p69 = scmp.ne.s32.totalorder %s61, %s63
    %p70 = scmp.eq.s32.totalorder %s18, 1
    %p71 = por %p69, %p70
    %p72 = scmp.ne.s32.totalorder %s63, %s64
    %p73 = scmp.eq.s32.totalorder %s18, 0
    %p74 = por %p72, %p73
    %p75 = scmp.ne.s32.totalorder %s63, %s64
    %p76 = scmp.eq.s32.totalorder %s19, 1
    %p77 = por %p75, %p76
    %p79 = scmp.ne.s32.totalorder %s64, %s78
    %p80 = scmp.eq.s32.totalorder %s19, 0
    %p81 = por %p79, %p80
    %s83 = sadd.s32 %s82, 1
    %p86 = scmp.eq.s32.totalorder %s13, 1
    %p87 = scmp.ne.s32.totalorder %s82, %s84
    %p88 = scmp.eq.s32.totalorder %s13, 0
    %p89 = por %p87, %p88
    %p90 = scmp.ne.s32.totalorder %s82, %s84
    %p91 = scmp.eq.s32.totalorder %s18, 1
    %p92 = por %p90, %p91
    %p93 = scmp.ne.s32.totalorder %s84, %s85
    %p94 = scmp.eq.s32.totalorder %s18, 0
    %p95 = por %p93, %p94
    %p96 = scmp.ne.s32.totalorder %s84, %s85
    %p97 = scmp.eq.s32.totalorder %s19, 1
    %p98 = por %p96, %p97
    %p100 = scmp.ne.s32.totalorder %s85, %s99
    %p101 = scmp.eq.s32.totalorder %s19, 0
    %p102 = por %p100, %p101
    %s104 = sadd.s32 %s103, 1
    %p107 = scmp.eq.s32.totalorder %s13, 1
    %p108 = scmp.ne.s32.totalorder %s103, %s105
    %p109 = scmp.eq.s32.totalorder %s13, 0
    %p110 = por %p108, %p109
    %p111 = scmp.ne.s32.totalorder %s103, %s105
    %p112 = scmp.eq.s32.totalorder %s18, 1
    %p113 = por %p111, %p112
    %p114 = scmp.ne.s32.totalorder %s105, %s106
    %p115 = scmp.eq.s32.totalorder %s18, 0
    %p116 = por %p114, %p115
    %p117 = scmp.ne.s32.totalorder %s105, %s106
    %p118 = scmp.eq.s32.totalorder %s19, 1
    %p119 = por %p117, %p118
    %p121 = scmp.ne.s32.totalorder %s106, %s120
    %p122 = scmp.eq.s32.totalorder %s19, 0
    %p123 = por %p121, %p122
    %s125 = sadd.s32 %s124, 1
    %p128 = scmp.eq.s32.totalorder %s13, 1
    %p129 = scmp.ne.s32.totalorder %s124, %s126
    %p130 = scmp.eq.s32.totalorder %s13, 0
    %p131 = por %p129, %p130
    %p132 = scmp.ne.s32.totalorder %s124, %s126
    %p133 = scmp.eq.s32.totalorder %s18, 1
    %p134 = por %p132, %p133
    %p135 = scmp.ne.s32.totalorder %s126, %s127
    %p136 = scmp.eq.s32.totalorder %s18, 0
    %p137 = por %p135, %p136
    %p138 = scmp.ne.s32.totalorder %s126, %s127
    %p139 = scmp.eq.s32.totalorder %s19, 1
    %p140 = por %p138, %p139
    %p142 = scmp.ne.s32.totalorder %s127, %s141
    %p143 = scmp.eq.s32.totalorder %s19, 0
    %p144 = por %p142, %p143
    %s146 = sadd.s32 %s145, 1
    %p149 = scmp.eq.s32.totalorder %s13, 1
    %p150 = scmp.ne.s32.totalorder %s145, %s147
    %p151 = scmp.eq.s32.totalorder %s13, 0
    %p152 = por %p150, %p151
    %p153 = scmp.ne.s32.totalorder %s145, %s147
    %p154 = scmp.eq.s32.totalorder %s18, 1
    %p155 = por %p153, %p154
    %p156 = scmp.ne.s32.totalorder %s147, %s148
    %p157 = scmp.eq.s32.totalorder %s18, 0
    %p158 = por %p156, %p157
    %p159 = scmp.ne.s32.totalorder %s147, %s148
    %p160 = scmp.eq.s32.totalorder %s19, 1
    %p161 = por %p159, %p160
    %p163 = scmp.ne.s32.totalorder %s148, %s162
    %p164 = scmp.eq.s32.totalorder %s19, 0
    %p165 = por %p163, %p164
    %s167 = sadd.s32 %s166, 1
    %p170 = scmp.eq.s32.totalorder %s13, 1
    %p171 = scmp.ne.s32.totalorder %s166, %s168
    %p172 = scmp.eq.s32.totalorder %s13, 0
    %p173 = por %p171, %p172
    %p174 = scmp.ne.s32.totalorder %s166, %s168
    %p175 = scmp.eq.s32.totalorder %s18, 1
    %p176 = por %p174, %p175
    %p177 = scmp.ne.s32.totalorder %s168, %s169
    %p178 = scmp.eq.s32.totalorder %s18, 0
    %p179 = por %p177, %p178
    %p180 = scmp.ne.s32.totalorder %s168, %s169
    %p181 = scmp.eq.s32.totalorder %s19, 1
    %p182 = por %p180, %p181
    %p184 = scmp.ne.s32.totalorder %s169, %s183
    %p185 = scmp.eq.s32.totalorder %s19, 0
    %p186 = por %p184, %p185
    %s187 = ssub.s32 %s20, %s32
    %s188 = ssub.s32 %s21, %s28
    %s189 = sor.u32 %s187, %s188
    %p190 = scmp.eq.s32.totalorder %s189, 0
    %s192 = sadd.s32 %s191, 1
    %s193 = scalar_select %p190, %s191, %s192
    %p196 = pneg %p190
    %p197 = scmp.eq.s32.totalorder %s13, 1
    %p198 = por %p196, %p197
    %p199 = scmp.ne.s32.totalorder %s191, %s194
    %p200 = scmp.eq.s32.totalorder %s13, 0
    %p201 = por %p199, %p200
    %p202 = scmp.ne.s32.totalorder %s191, %s194
    %p203 = scmp.eq.s32.totalorder %s18, 1
    %p204 = por %p202, %p203
    %p205 = scmp.ne.s32.totalorder %s194, %s195
    %p206 = scmp.eq.s32.totalorder %s18, 0
    %p207 = por %p205, %p206
    %p208 = scmp.ne.s32.totalorder %s194, %s195
    %p209 = scmp.eq.s32.totalorder %s19, 1
    %p210 = por %p208, %p209
    %p212 = scmp.ne.s32.totalorder %s195, %s211
    %p213 = scmp.eq.s32.totalorder %s19, 0
    %p214 = por %p212, %p213
    %p215 = scmp.le.s32.totalorder 1, %s13
    %p216 = scmp.lt.s32.totalorder %s13, 3
    %p217 = pnand %p215, %p216
    %p218 = pneg %p217
    // Predicated region
    $region9: #{transformer_causal_forward.8} parent=5 // pred_check
      _
    $region10: #{transformer_causal_forward.8} parent=5 // pred_check_branch
      %220 = sbr.rel (%p217) target = $region12
    $region11: #{transformer_causal_forward.8} parent=5 // pred_region
      %s221 = ssub.s32 %s13, 1
      // Predicated region
      $region13: #{transformer_causal_forward.8} parent=11 // pred_check
        %p222 = pneg %p74
      $region14: #{transformer_causal_forward.8} parent=11 // pred_check_branch
        %224 = sbr.rel (%p222) target = $region16
      $region15: #{transformer_causal_forward.8} parent=11 // pred_region
        _
      $region16: #{transformer_causal_forward.8} parent=11 // pred_fallthru
        _
      // Predicated region
      $region17: #{transformer_causal_forward.8} parent=11 // pred_check
        %p225 = pneg %p95
      $region18: #{transformer_causal_forward.8} parent=11 // pred_check_branch
        %227 = sbr.rel (%p225) target = $region20
      $region19: #{transformer_causal_forward.8} parent=11 // pred_region
        _
      $region20: #{transformer_causal_forward.8} parent=11 // pred_fallthru
        _
      // Predicated region
      $region21: #{transformer_causal_forward.8} parent=11 // pred_check
        %p228 = pneg %p116
      $region22: #{transformer_causal_forward.8} parent=11 // pred_check_branch
        %230 = sbr.rel (%p228) target = $region24
      $region23: #{transformer_causal_forward.8} parent=11 // pred_region
        _
      $region24: #{transformer_causal_forward.8} parent=11 // pred_fallthru
        _
      // Predicated region
      $region25: #{transformer_causal_forward.8} parent=11 // pred_check
        %p231 = pneg %p137
      $region26: #{transformer_causal_forward.8} parent=11 // pred_check_branch
        %233 = sbr.rel (%p231) target = $region28
      $region27: #{transformer_causal_forward.8} parent=11 // pred_region
        _
      $region28: #{transformer_causal_forward.8} parent=11 // pred_fallthru
        _
      // Predicated region
      $region29: #{transformer_causal_forward.8} parent=11 // pred_check
        %p234 = pneg %p158
      $region30: #{transformer_causal_forward.8} parent=11 // pred_check_branch
        %236 = sbr.rel (%p234) target = $region32
      $region31: #{transformer_causal_forward.8} parent=11 // pred_region
        _
      $region32: #{transformer_causal_forward.8} parent=11 // pred_fallthru
        _
      // Predicated region
      $region33: #{transformer_causal_forward.8} parent=11 // pred_check
        %p237 = pneg %p179
      $region34: #{transformer_causal_forward.8} parent=11 // pred_check_branch
        %239 = sbr.rel (%p237) target = $region36
      $region35: #{transformer_causal_forward.8} parent=11 // pred_region
        _
      $region36: #{transformer_causal_forward.8} parent=11 // pred_fallthru
        _
    $region12: #{transformer_causal_forward.8} parent=5 // pred_fallthru
      _
    %p240 = scmp.lt.s32.totalorder %s13, 2
    // Predicated region
    $region37: #{transformer_causal_forward.8} parent=5 // pred_check
      %p241 = pneg %p240
    $region38: #{transformer_causal_forward.8} parent=5 // pred_check_branch
      %243 = sbr.rel (%p241) target = $region40
    $region39: #{transformer_causal_forward.8} parent=5 // pred_region
      // Predicated region
      $region41: #{transformer_causal_forward.8} parent=39 // pred_check
        %p244 = pneg %p47
      $region42: #{transformer_causal_forward.8} parent=39 // pred_check_branch
        %246 = sbr.rel (%p244) target = $region44
      $region43: #{transformer_causal_forward.8} parent=39 // pred_region
        %p247 = scmp.lt.s32.totalorder %s20, 1
        %s248 = scalar_select %p247, %s20, 1
        %p249 = scmp.lt.s32.totalorder %s21, 0
        %s250 = scalar_select %p249, %s21, 0
        %s251 = sadd.s32 %s250, %s248
        %s252 = smul.addr %s251, 4
        %s253 = scalar_lea.vmem %s0, %s252
      $region44: #{transformer_causal_forward.8} parent=39 // pred_fallthru
        _
    $region40: #{transformer_causal_forward.8} parent=5 // pred_fallthru
      _
    %p254 = scmp.le.s32.totalorder 1, %s13
    %p255 = scmp.lt.s32.totalorder %s13, 3
    %p256 = pnand %p254, %p255
    %p257 = pneg %p256
    // Predicated region
    $region45: #{transformer_causal_forward.8} parent=5 // pred_check
      _
    $region46: #{transformer_causal_forward.8} parent=5 // pred_check_branch
      %259 = sbr.rel (%p256) target = $region48
    $region47: #{transformer_causal_forward.8} parent=5 // pred_region
      %s260 = ssub.s32 %s13, 1
      %p261 = scmp.lt.s32.totalorder %s22, 1
      %s262 = scalar_select %p261, %s22, 1
      %p263 = scmp.lt.s32.totalorder %s23, 0
      %s264 = scalar_select %p263, %s23, 0
      %s265 = sadd.s32 %s264, %s262
      %s266 = smul.addr %s265, 4
      %s267 = scalar_lea.vmem %s0, %s266
      %p268 = pneg %p53
      %p269 = pneg %p50
      %p270 = pneg %p74
      %p271 = pneg %p71
      %p272 = pneg %p95
      %p273 = pneg %p92
      %p274 = pneg %p116
      %p275 = pneg %p113
      %p276 = pneg %p137
      %p277 = pneg %p134
      %p278 = pneg %p158
      %p279 = pneg %p155
      %p280 = pneg %p179
      %p281 = pneg %p176
      %p282 = pneg %p207
      %p283 = pneg %p204
      %p284 = scmp.lt.s32.totalorder %s22, 1
      %s285 = scalar_select %p284, %s22, 1
      %p286 = scmp.lt.s32.totalorder %s23, 0
      %s287 = scalar_select %p286, %s23, 0
      %s288 = sadd.s32 %s287, %s285
      %s289 = smul.addr %s288, 4
      %s290 = scalar_lea.vmem %s7, %s289
      %p291 = scmp.lt.s32.totalorder %s22, 1
      %s292 = scalar_select %p291, %s22, 1
      %p293 = scmp.lt.s32.totalorder %s23, 0
      %s294 = scalar_select %p293, %s23, 0
      %s295 = sadd.s32 %s294, %s292
      %s296 = smul.addr %s295, 4
      %s297 = scalar_lea.vmem %s0, %s296
      %p298 = scmp.lt.s32.totalorder %s22, 1
      %s299 = scalar_select %p298, %s22, 1
      %p300 = scmp.lt.s32.totalorder %s23, 0
      %s301 = scalar_select %p300, %s23, 0
      %s302 = sadd.s32 %s301, %s299
      %s303 = smul.addr %s302, 4
      %s304 = scalar_lea.vmem %s7, %s303
      %v306 = vld [vmem:[%s297] sm:$0xf]
      %v307 = vld [vmem:[%s1] sm:$0xf]
      %v308 = vld [vmem:[%s1 + $0x4] sm:$0xf]
      %v309 = vld [vmem:[%s1 + $0x8] sm:$0xf]
      %v310 = vld [vmem:[%s1 + $0xc] sm:$0xf]
      %v311 = vld [vmem:[%s2] sm:$0x1]
      %v313 = vperm.slane %v311, 0
      %v319 = vunpack.c.l.b16 %v307
      %v320 = vunpack.c.l.b16 %v308
      %v321 = vunpack.c.l.b16 %v309
      %v322 = vunpack.c.l.b16 %v310
      %v323 = vpack.c.b16 %v320, %v319
      %v324 = vpack.c.b16 %v322, %v321
      %vm327 = vcmask 261120
      %v329 = vsel %vm327, %v306, 0
      %331 = vmatpush.bf16.msra.mxu0 0
      %332 = vmatpush.bf16.msra.mxu0 0
      %333 = vmatpush.bf16.msra.mxu0 0
      %334 = vmatpush.bf16.msra.mxu0 0
      %335 = vmatpush.bf16.msra.mxu0 0
      %336 = vmatpush.bf16.msra.mxu0 0
      %337 = vmatpush.bf16.msra.mxu0 %v324
      %338 = vmatpush.bf16.msra.mxu0 %v323
      %339 = vmatmul.bf16.gmra.mxu0 %v329
      %v340 = vpop.f32.mrf.mxu0
      %v341 = vadd.f32 %v313, %v340
      %v342 = vpop.f32.mrf.mxu0
      %343 = vdwg.mxu0
      %v344 = vmax.f32 %v341, 0.0
      %v345 = vpack.c.bf16 %v344, %v344
      %v346 = vld [vmem:[%s3] sm:$0xf]
      %v347 = vld [vmem:[%s3 + $0x4] sm:$0xf]
      %v348 = vld [vmem:[%s3 + $0x8] sm:$0xf]
      %v349 = vld [vmem:[%s3 + $0xc] sm:$0xf]
      %v350 = vld [vmem:[%s4] sm:$0x1]
      %v352 = vperm.slane %v350, 0
      %v358 = vunpack.c.l.b16 %v346
      %v359 = vunpack.c.l.b16 %v347
      %v360 = vunpack.c.l.b16 %v348
      %v361 = vunpack.c.l.b16 %v349
      %v362 = vpack.c.b16 %v359, %v358
      %v363 = vpack.c.b16 %v361, %v360
      %v367 = vsel %vm327, %v345, 0
      %369 = vmatpush.bf16.msra.mxu0 0
      %370 = vmatpush.bf16.msra.mxu0 0
      %371 = vmatpush.bf16.msra.mxu0 0
      %372 = vmatpush.bf16.msra.mxu0 0
      %373 = vmatpush.bf16.msra.mxu0 0
      %374 = vmatpush.bf16.msra.mxu0 0
      %375 = vmatpush.bf16.msra.mxu0 %v363
      %376 = vmatpush.bf16.msra.mxu0 %v362
      %377 = vmatmul.bf16.gmra.mxu0 %v367
      %v378 = vpop.f32.mrf.mxu0
      %v379 = vadd.f32 %v352, %v378
      %v380 = vpop.f32.mrf.mxu0
      %381 = vdwg.mxu0
      %v382 = vunpack.c.l.bf16 %v306
      %v383 = vadd.f32 %v382, %v379
      %v384 = vld [vmem:[%s5] sm:$0x1]
      %v385 = vld [vmem:[%s6] sm:$0x1]
      %v386 = vsel %vm327, %v383, 0.0
      %387 = vadd.xlane.f32.xlu0 %v386
      %v388 = vpop.xlane.xlu0 %387
      %v389 = vrcp.pop 32.0
      %v390 = vmul.f32 32.0, %v389
      %v391 = vsub.f32 1.0, %v390
      %v392 = vmul.f32 %v389, %v391
      %v393 = vadd.f32 %v389, %v392
      %vm394 = vweird.f32 %v389
      %v395 = vsel %vm394, %v389, %v393
      %v396 = vmul.f32 %v388, %v395
      %v397 = vsub.f32 %v383, %v396
      %v398 = vmul.f32 %v397, %v397
      %v399 = vsel %vm327, %v398, 0.0
      %400 = vadd.xlane.f32.xlu0 %v399
      %v401 = vpop.xlane.xlu0 %400
      %v402 = vmul.f32 %v401, %v395
      %v403 = vadd.f32 %v402, 1e-05
      %v404 = vrsqrt.pop %v403
      %v405 = vmul.f32 %v404, %v403
      %v406 = vmul.f32 %v405, %v404
      %v407 = vmul.f32 0.5, %v406
      %v408 = vsub.f32 1.5, %v407
      %v409 = vmul.f32 %v404, %v408
      %vm410 = vweird.f32 %v403
      %vm411 = vweird.f32 %v404
      %vm412 = vmor %vm410, %vm411
      %v413 = vsel %vm412, %v404, %v409
      %v414 = vmul.f32 %v397, %v413
      %v416 = vperm.slane %v384, 0
      %v418 = vmul.f32 %v414, %v416
      %v420 = vperm.slane %v385, 0
      %v422 = vadd.f32 %v418, %v420
      %v423 = vpack.c.bf16 %v422, %v422
      %vm424 = vcmask 257024
      %425 = vst.msk [vmem:[%s304] sm:$0xf] %vm424, %v423
      %p426 = scmp.lt.s32.totalorder %s22, 1
      %s427 = scalar_select %p426, %s22, 1
      %p428 = scmp.lt.s32.totalorder %s23, 0
      %s429 = scalar_select %p428, %s23, 0
      %s430 = sadd.s32 %s429, %s427
      %s431 = smul.addr %s430, 4
      %s432 = scalar_lea.vmem %s7, %s431
      // Predicated region
      $region49: #{transformer_causal_forward.8} parent=47 // pred_check
        %p433 = pneg %p204
      $region50: #{transformer_causal_forward.8} parent=47 // pred_check_branch
        %435 = sbr.rel (%p433) target = $region52
      $region51: #{transformer_causal_forward.8} parent=47 // pred_region
        _
      $region52: #{transformer_causal_forward.8} parent=47 // pred_fallthru
        _
    $region48: #{transformer_causal_forward.8} parent=5 // pred_fallthru
      _
    %p436 = scmp.le.s32.totalorder 2, %s13
    // Predicated region
    $region53: #{transformer_causal_forward.8} parent=5 // pred_check
      %p437 = pneg %p436
    $region54: #{transformer_causal_forward.8} parent=5 // pred_check_branch
      %439 = sbr.rel (%p437) target = $region56
    $region55: #{transformer_causal_forward.8} parent=5 // pred_region
      %s440 = ssub.s32 %s13, 2
      // Predicated region
      $region57: #{transformer_causal_forward.8} parent=55 // pred_check
        %p441 = pneg %p210
      $region58: #{transformer_causal_forward.8} parent=55 // pred_check_branch
        %443 = sbr.rel (%p441) target = $region60
      $region59: #{transformer_causal_forward.8} parent=55 // pred_region
        %p444 = scmp.lt.s32.totalorder %s24, 1
        %s445 = scalar_select %p444, %s24, 1
        %p446 = scmp.lt.s32.totalorder %s25, 0
        %s447 = scalar_select %p446, %s25, 0
        %s448 = sadd.s32 %s447, %s445
        %s449 = smul.addr %s448, 4
        %s450 = scalar_lea.vmem %s7, %s449
      $region60: #{transformer_causal_forward.8} parent=55 // pred_fallthru
        _
    $region56: #{transformer_causal_forward.8} parent=5 // pred_fallthru
      _
  $region6: #{transformer_causal_forward.8} parent=0 // loop_footer
    %s17 = sadd.s32 1, %s13
  $region7: #{transformer_causal_forward.8} parent=0 // loop_footer_branch
    %12 = sbr.rel target = $region3
  $region8: #{transformer_causal_forward.8} parent=0 // loop_exit
    _

// kernel: transformer_causal_forward.6
$region0: #{transformer_causal_forward.6}
  #allocation0 [shape = 'u32[]', space=smem, size = 0x4, offset = 0x4, fixed_abs, tag = 'smem constant byte address 0x4 - core index']
  #allocation1 [shape = 'u32[72,128]{1,0:T(1,128)}', space=vmem, size = 0x9000, scoped, tag = 'internal scratch']
  #allocation2 [shape = 'f32[128,128]{1,0:T(8,128)}', space=vmem, size = 0x10000, scoped, tag = 'scratch operand']
  %s0 = inlined_call_operand.vmem [shape: bf16[128,128], index: 0, kind: input, shape index: {}]
  %s1 = inlined_call_operand.vmem [shape: bf16[128,128], index: 1, kind: input, shape index: {}]
  %s2 = inlined_call_operand.vmem [shape: f32[1,128], index: 2, kind: input, shape index: {}]
  %s3 = inlined_call_operand.vmem [shape: bf16[128,128], index: 3, kind: output, shape index: {}]
  %s4 = sld [smem:[#allocation0]]
  $region30: #{transformer_causal_forward.6} parent=0
    _
  %s6 = ssub.s32 1, %s4
  %s7 = scalar_select 0, %s6, %s4
  // Predicated region
  $region2: #{transformer_causal_forward.6} parent=0 // pred_check
    _
  $region3: #{transformer_causal_forward.6} parent=0 // pred_check_branch
    %9 = sbr.rel (0) target = $region5
  $region4: #{transformer_causal_forward.6} parent=0 // pred_region
    _
  $region5: #{transformer_causal_forward.6} parent=0 // pred_fallthru
    _
  // Predicated region
  $region6: #{transformer_causal_forward.6} parent=0 // pred_check
    _
  $region7: #{transformer_causal_forward.6} parent=0 // pred_check_branch
    %11 = sbr.rel (0) target = $region9
  $region8: #{transformer_causal_forward.6} parent=0 // pred_region
    _
  $region9: #{transformer_causal_forward.6} parent=0 // pred_fallthru
    _
  // Predicated region
  $region10: #{transformer_causal_forward.6} parent=0 // pred_check
    _
  $region11: #{transformer_causal_forward.6} parent=0 // pred_check_branch
    %13 = sbr.rel (0) target = $region13
  $region12: #{transformer_causal_forward.6} parent=0 // pred_region
    _
  $region13: #{transformer_causal_forward.6} parent=0 // pred_fallthru
    _
  %p14 = scmp.eq.s32.totalorder 0, 0
  // Predicated region
  $region14: #{transformer_causal_forward.6} parent=0 // pred_check
    %p15 = pneg %p14
  $region15: #{transformer_causal_forward.6} parent=0 // pred_check_branch
    %17 = sbr.rel (%p15) target = $region17
  $region16: #{transformer_causal_forward.6} parent=0 // pred_region
    %18 = vst [vmem:[#allocation2] sm:$0xff] 0.0
    %19 = vst [vmem:[#allocation2 + $0x8] sm:$0xff] 0.0
    %20 = vst [vmem:[#allocation2 + $0x10] sm:$0xff] 0.0
    %21 = vst [vmem:[#allocation2 + $0x18] sm:$0xff] 0.0
    %22 = vst [vmem:[#allocation2 + $0x20] sm:$0xff] 0.0
    %23 = vst [vmem:[#allocation2 + $0x28] sm:$0xff] 0.0
    %24 = vst [vmem:[#allocation2 + $0x30] sm:$0xff] 0.0
    %25 = vst [vmem:[#allocation2 + $0x38] sm:$0xff] 0.0
    %26 = vst [vmem:[#allocation2 + $0x40] sm:$0xff] 0.0
    %27 = vst [vmem:[#allocation2 + $0x48] sm:$0xff] 0.0
    %28 = vst [vmem:[#allocation2 + $0x50] sm:$0xff] 0.0
    %29 = vst [vmem:[#allocation2 + $0x58] sm:$0xff] 0.0
    %30 = vst [vmem:[#allocation2 + $0x60] sm:$0xff] 0.0
    %31 = vst [vmem:[#allocation2 + $0x68] sm:$0xff] 0.0
    %32 = vst [vmem:[#allocation2 + $0x70] sm:$0xff] 0.0
    %33 = vst [vmem:[#allocation2 + $0x78] sm:$0xff] 0.0
  $region17: #{transformer_causal_forward.6} parent=0 // pred_fallthru
    _
  %v34 = vld [vmem:[#allocation2] sm:$0xff]
  %v35 = vld [vmem:[#allocation2 + $0x8] sm:$0xff]
  %v36 = vld [vmem:[#allocation2 + $0x10] sm:$0xff]
  %v37 = vld [vmem:[#allocation2 + $0x18] sm:$0xff]
  %v38 = vld [vmem:[#allocation2 + $0x20] sm:$0xff]
  %v39 = vld [vmem:[#allocation2 + $0x28] sm:$0xff]
  %v40 = vld [vmem:[#allocation2 + $0x30] sm:$0xff]
  %v41 = vld [vmem:[#allocation2 + $0x38] sm:$0xff]
  %v42 = vld [vmem:[#allocation2 + $0x40] sm:$0xff]
  %v43 = vld [vmem:[#allocation2 + $0x48] sm:$0xff]
  %v44 = vld [vmem:[#allocation2 + $0x50] sm:$0xff]
  %v45 = vld [vmem:[#allocation2 + $0x58] sm:$0xff]
  %v46 = vld [vmem:[#allocation2 + $0x60] sm:$0xff]
  %v47 = vld [vmem:[#allocation2 + $0x68] sm:$0xff]
  %v48 = vld [vmem:[#allocation2 + $0x70] sm:$0xff]
  %v49 = vld [vmem:[#allocation2 + $0x78] sm:$0xff]
  %v50 = vld [vmem:[%s0] sm:$0xf]
  %v51 = vld [vmem:[%s0 + $0x4] sm:$0xf]
  %v52 = vld [vmem:[%s0 + $0x8] sm:$0xf]
  %v53 = vld [vmem:[%s0 + $0xc] sm:$0xf]
  %v54 = vld [vmem:[%s0 + $0x10] sm:$0xf]
  %v55 = vld [vmem:[%s0 + $0x14] sm:$0xf]
  %v56 = vld [vmem:[%s0 + $0x18] sm:$0xf]
  %v57 = vld [vmem:[%s0 + $0x1c] sm:$0xf]
  %v58 = vld [vmem:[%s0 + $0x20] sm:$0xf]
  %v59 = vld [vmem:[%s0 + $0x24] sm:$0xf]
  %v60 = vld [vmem:[%s0 + $0x28] sm:$0xf]
  %v61 = vld [vmem:[%s0 + $0x2c] sm:$0xf]
  %v62 = vld [vmem:[%s0 + $0x30] sm:$0xf]
  %v63 = vld [vmem:[%s0 + $0x34] sm:$0xf]
  %v64 = vld [vmem:[%s0 + $0x38] sm:$0xf]
  %v65 = vld [vmem:[%s0 + $0x3c] sm:$0xf]
  %v66 = vld [vmem:[%s1] sm:$0xf]
  %v67 = vld [vmem:[%s1 + $0x4] sm:$0xf]
  %v68 = vld [vmem:[%s1 + $0x8] sm:$0xf]
  %v69 = vld [vmem:[%s1 + $0xc] sm:$0xf]
  %v70 = vld [vmem:[%s1 + $0x10] sm:$0xf]
  %v71 = vld [vmem:[%s1 + $0x14] sm:$0xf]
  %v72 = vld [vmem:[%s1 + $0x18] sm:$0xf]
  %v73 = vld [vmem:[%s1 + $0x1c] sm:$0xf]
  %v74 = vld [vmem:[%s1 + $0x20] sm:$0xf]
  %v75 = vld [vmem:[%s1 + $0x24] sm:$0xf]
  %v76 = vld [vmem:[%s1 + $0x28] sm:$0xf]
  %v77 = vld [vmem:[%s1 + $0x2c] sm:$0xf]
  %v78 = vld [vmem:[%s1 + $0x30] sm:$0xf]
  %v79 = vld [vmem:[%s1 + $0x34] sm:$0xf]
  %v80 = vld [vmem:[%s1 + $0x38] sm:$0xf]
  %v81 = vld [vmem:[%s1 + $0x3c] sm:$0xf]
  %v98 = vunpack.c.l.b16 %v50
  %v99 = vunpack.c.l.b16 %v51
  %v100 = vunpack.c.l.b16 %v52
  %v101 = vunpack.c.l.b16 %v53
  %v102 = vunpack.c.l.b16 %v54
  %v103 = vunpack.c.l.b16 %v55
  %v104 = vunpack.c.l.b16 %v56
  %v105 = vunpack.c.l.b16 %v57
  %v106 = vunpack.c.l.b16 %v58
  %v107 = vunpack.c.l.b16 %v59
  %v108 = vunpack.c.l.b16 %v60
  %v109 = vunpack.c.l.b16 %v61
  %v110 = vunpack.c.l.b16 %v62
  %v111 = vunpack.c.l.b16 %v63
  %v112 = vunpack.c.l.b16 %v64
  %v113 = vunpack.c.l.b16 %v65
  %v114 = vpack.c.b16 %v99, %v98
  %v115 = vpack.c.b16 %v101, %v100
  %v116 = vpack.c.b16 %v103, %v102
  %v117 = vpack.c.b16 %v105, %v104
  %v118 = vpack.c.b16 %v107, %v106
  %v119 = vpack.c.b16 %v109, %v108
  %v120 = vpack.c.b16 %v111, %v110
  %v121 = vpack.c.b16 %v113, %v112
  %v146 = vunpack.c.l.b16 %v66
  %v147 = vunpack.c.l.b16 %v67
  %v148 = vunpack.c.l.b16 %v68
  %v149 = vunpack.c.l.b16 %v69
  %v150 = vunpack.c.l.b16 %v70
  %v151 = vunpack.c.l.b16 %v71
  %v152 = vunpack.c.l.b16 %v72
  %v153 = vunpack.c.l.b16 %v73
  %v154 = vunpack.c.l.b16 %v74
  %v155 = vunpack.c.l.b16 %v75
  %v156 = vunpack.c.l.b16 %v76
  %v157 = vunpack.c.l.b16 %v77
  %v158 = vunpack.c.l.b16 %v78
  %v159 = vunpack.c.l.b16 %v79
  %v160 = vunpack.c.l.b16 %v80
  %v161 = vunpack.c.l.b16 %v81
  %v162 = vpack.c.b16 %v147, %v146
  %v163 = vpack.c.b16 %v149, %v148
  %v164 = vpack.c.b16 %v151, %v150
  %v165 = vpack.c.b16 %v153, %v152
  %v166 = vpack.c.b16 %v155, %v154
  %v167 = vpack.c.b16 %v157, %v156
  %v168 = vpack.c.b16 %v159, %v158
  %v169 = vpack.c.b16 %v161, %v160
  %178 = vmatpush.bf16.msra.mxu0 %v169
  %179 = vmatpush.bf16.msra.mxu0 %v168
  %180 = vmatpush.bf16.msra.mxu0 %v167
  %181 = vmatpush.bf16.msra.mxu0 %v166
  %182 = vmatpush.bf16.msra.mxu0 %v165
  %183 = vmatpush.bf16.msra.mxu0 %v164
  %184 = vmatpush.bf16.msra.mxu0 %v163
  %185 = vmatpush.bf16.msra.mxu0 %v162
  %186 = vmatmul.bf16.gmra.mxu0 %v114
  %v187 = vpop.f32.mrf.mxu0
  %v188 = vadd.f32 0.0, %v187
  %v189 = vpop.f32.mrf.mxu0
  %v190 = vadd.f32 0.0, %v189
  %191 = vmatmul.bf16.gmra.mxu0 %v115
  %v192 = vpop.f32.mrf.mxu0
  %v193 = vadd.f32 0.0, %v192
  %v194 = vpop.f32.mrf.mxu0
  %v195 = vadd.f32 0.0, %v194
  %196 = vmatmul.bf16.gmra.mxu0 %v116
  %v197 = vpop.f32.mrf.mxu0
  %v198 = vadd.f32 0.0, %v197
  %v199 = vpop.f32.mrf.mxu0
  %v200 = vadd.f32 0.0, %v199
  %201 = vmatmul.bf16.gmra.mxu0 %v117
  %v202 = vpop.f32.mrf.mxu0
  %v203 = vadd.f32 0.0, %v202
  %v204 = vpop.f32.mrf.mxu0
  %v205 = vadd.f32 0.0, %v204
  %206 = vmatmul.bf16.gmra.mxu0 %v118
  %v207 = vpop.f32.mrf.mxu0
  %v208 = vadd.f32 0.0, %v207
  %v209 = vpop.f32.mrf.mxu0
  %v210 = vadd.f32 0.0, %v209
  %211 = vmatmul.bf16.gmra.mxu0 %v119
  %v212 = vpop.f32.mrf.mxu0
  %v213 = vadd.f32 0.0, %v212
  %v214 = vpop.f32.mrf.mxu0
  %v215 = vadd.f32 0.0, %v214
  %216 = vmatmul.bf16.gmra.mxu0 %v120
  %v217 = vpop.f32.mrf.mxu0
  %v218 = vadd.f32 0.0, %v217
  %v219 = vpop.f32.mrf.mxu0
  %v220 = vadd.f32 0.0, %v219
  %221 = vmatmul.bf16.gmra.mxu0 %v121
  %v222 = vpop.f32.mrf.mxu0
  %v223 = vadd.f32 0.0, %v222
  %v224 = vpop.f32.mrf.mxu0
  %v225 = vadd.f32 0.0, %v224
  %226 = vdwg.mxu0
  %v227 = vadd.f32 %v34, %v188
  %v228 = vadd.f32 %v35, %v190
  %v229 = vadd.f32 %v36, %v193
  %v230 = vadd.f32 %v37, %v195
  %v231 = vadd.f32 %v38, %v198
  %v232 = vadd.f32 %v39, %v200
  %v233 = vadd.f32 %v40, %v203
  %v234 = vadd.f32 %v41, %v205
  %v235 = vadd.f32 %v42, %v208
  %v236 = vadd.f32 %v43, %v210
  %v237 = vadd.f32 %v44, %v213
  %v238 = vadd.f32 %v45, %v215
  %v239 = vadd.f32 %v46, %v218
  %v240 = vadd.f32 %v47, %v220
  %v241 = vadd.f32 %v48, %v223
  %v242 = vadd.f32 %v49, %v225
  %243 = vst [vmem:[#allocation2] sm:$0xff] %v227
  %244 = vst [vmem:[#allocation2 + $0x8] sm:$0xff] %v228
  %245 = vst [vmem:[#allocation2 + $0x10] sm:$0xff] %v229
  %246 = vst [vmem:[#allocation2 + $0x18] sm:$0xff] %v230
  %247 = vst [vmem:[#allocation2 + $0x20] sm:$0xff] %v231
  %248 = vst [vmem:[#allocation2 + $0x28] sm:$0xff] %v232
  %249 = vst [vmem:[#allocation2 + $0x30] sm:$0xff] %v233
  %250 = vst [vmem:[#allocation2 + $0x38] sm:$0xff] %v234
  %251 = vst [vmem:[#allocation2 + $0x40] sm:$0xff] %v235
  %252 = vst [vmem:[#allocation2 + $0x48] sm:$0xff] %v236
  %253 = vst [vmem:[#allocation2 + $0x50] sm:$0xff] %v237
  %254 = vst [vmem:[#allocation2 + $0x58] sm:$0xff] %v238
  %255 = vst [vmem:[#allocation2 + $0x60] sm:$0xff] %v239
  %256 = vst [vmem:[#allocation2 + $0x68] sm:$0xff] %v240
  %257 = vst [vmem:[#allocation2 + $0x70] sm:$0xff] %v241
  %258 = vst [vmem:[#allocation2 + $0x78] sm:$0xff] %v242
  // Predicated region
  $region18: #{transformer_causal_forward.6} parent=0 // pred_check
    %p259 = pneg %p14
  $region19: #{transformer_causal_forward.6} parent=0 // pred_check_branch
    %261 = sbr.rel (%p259) target = $region21
  $region20: #{transformer_causal_forward.6} parent=0 // pred_region
    %v262 = vld [vmem:[#allocation2] sm:$0xff]
    %v263 = vld [vmem:[#allocation2 + $0x8] sm:$0xff]
    %v264 = vld [vmem:[#allocation2 + $0x10] sm:$0xff]
    %v265 = vld [vmem:[#allocation2 + $0x18] sm:$0xff]
    %v266 = vld [vmem:[#allocation2 + $0x20] sm:$0xff]
    %v267 = vld [vmem:[#allocation2 + $0x28] sm:$0xff]
    %v268 = vld [vmem:[#allocation2 + $0x30] sm:$0xff]
    %v269 = vld [vmem:[#allocation2 + $0x38] sm:$0xff]
    %v270 = vld [vmem:[#allocation2 + $0x40] sm:$0xff]
    %v271 = vld [vmem:[#allocation2 + $0x48] sm:$0xff]
    %v272 = vld [vmem:[#allocation2 + $0x50] sm:$0xff]
    %v273 = vld [vmem:[#allocation2 + $0x58] sm:$0xff]
    %v274 = vld [vmem:[#allocation2 + $0x60] sm:$0xff]
    %v275 = vld [vmem:[#allocation2 + $0x68] sm:$0xff]
    %v276 = vld [vmem:[#allocation2 + $0x70] sm:$0xff]
    %v277 = vld [vmem:[#allocation2 + $0x78] sm:$0xff]
    %v278 = vld [vmem:[%s2] sm:$0x1]
    %v280 = vperm.slane %v278, 0
    %v282 = vadd.f32 %v262, %v280
    %v283 = vadd.f32 %v263, %v280
    %v284 = vadd.f32 %v264, %v280
    %v285 = vadd.f32 %v265, %v280
    %v286 = vadd.f32 %v266, %v280
    %v287 = vadd.f32 %v267, %v280
    %v288 = vadd.f32 %v268, %v280
    %v289 = vadd.f32 %v269, %v280
    %v290 = vadd.f32 %v270, %v280
    %v291 = vadd.f32 %v271, %v280
    %v292 = vadd.f32 %v272, %v280
    %v293 = vadd.f32 %v273, %v280
    %v294 = vadd.f32 %v274, %v280
    %v295 = vadd.f32 %v275, %v280
    %v296 = vadd.f32 %v276, %v280
    %v297 = vadd.f32 %v277, %v280
    %v298 = vpack.c.bf16 %v282, %v282
    %v299 = vpack.c.bf16 %v283, %v283
    %v300 = vpack.c.bf16 %v284, %v284
    %v301 = vpack.c.bf16 %v285, %v285
    %v302 = vpack.c.bf16 %v286, %v286
    %v303 = vpack.c.bf16 %v287, %v287
    %v304 = vpack.c.bf16 %v288, %v288
    %v305 = vpack.c.bf16 %v289, %v289
    %v306 = vpack.c.bf16 %v290, %v290
    %v307 = vpack.c.bf16 %v291, %v291
    %v308 = vpack.c.bf16 %v292, %v292
    %v309 = vpack.c.bf16 %v293, %v293
    %v310 = vpack.c.bf16 %v294, %v294
    %v311 = vpack.c.bf16 %v295, %v295
    %v312 = vpack.c.bf16 %v296, %v296
    %v313 = vpack.c.bf16 %v297, %v297
    %314 = vst [vmem:[%s3] sm:$0xf] %v298
    %315 = vst [vmem:[%s3 + $0x4] sm:$0xf] %v299
    %316 = vst [vmem:[%s3 + $0x8] sm:$0xf] %v300
    %317 = vst [vmem:[%s3 + $0xc] sm:$0xf] %v301
    %318 = vst [vmem:[%s3 + $0x10] sm:$0xf] %v302
    %319 = vst [vmem:[%s3 + $0x14] sm:$0xf] %v303
    %320 = vst [vmem:[%s3 + $0x18] sm:$0xf] %v304
    %321 = vst [vmem:[%s3 + $0x1c] sm:$0xf] %v305
    %322 = vst [vmem:[%s3 + $0x20] sm:$0xf] %v306
    %323 = vst [vmem:[%s3 + $0x24] sm:$0xf] %v307
    %324 = vst [vmem:[%s3 + $0x28] sm:$0xf] %v308
    %325 = vst [vmem:[%s3 + $0x2c] sm:$0xf] %v309
    %326 = vst [vmem:[%s3 + $0x30] sm:$0xf] %v310
    %327 = vst [vmem:[%s3 + $0x34] sm:$0xf] %v311
    %328 = vst [vmem:[%s3 + $0x38] sm:$0xf] %v312
    %329 = vst [vmem:[%s3 + $0x3c] sm:$0xf] %v313
  $region21: #{transformer_causal_forward.6} parent=0 // pred_fallthru
    _
  // Predicated region
  $region22: #{transformer_causal_forward.6} parent=0 // pred_check
    _
  $region23: #{transformer_causal_forward.6} parent=0 // pred_check_branch
    %331 = sbr.rel (0) target = $region25
  $region24: #{transformer_causal_forward.6} parent=0 // pred_region
    _
  $region25: #{transformer_causal_forward.6} parent=0 // pred_fallthru
    _
  // Predicated region
  $region26: #{transformer_causal_forward.6} parent=0 // pred_check
    _
  $region27: #{transformer_causal_forward.6} parent=0 // pred_check_branch
    %333 = sbr.rel (0) target = $region29
  $region28: #{transformer_causal_forward.6} parent=0 // pred_region
    _
  $region29: #{transformer_causal_forward.6} parent=0 // pred_fallthru
    _

// kernel: transformer_causal_forward.11
$region0: #{transformer_causal_forward.11}
  #allocation0 [shape = 'u32[]', space=smem, size = 0x4, offset = 0x4, fixed_abs, tag = 'smem constant byte address 0x4 - core index']
  #allocation1 [shape = 'u32[72,128]{1,0:T(1,128)}', space=vmem, size = 0x9000, scoped, tag = 'internal scratch']
  #allocation2 [shape = 'f32[128,128]{1,0:T(8,128)}', space=vmem, size = 0x10000, scoped, tag = 'scratch operand']
  %s0 = inlined_call_operand.vmem [shape: bf16[128,128], index: 0, kind: input, shape index: {}]
  %s1 = inlined_call_operand.vmem [shape: bf16[128,128], index: 1, kind: input, shape index: {}]
  %s2 = inlined_call_operand.vmem [shape: f32[1,128], index: 2, kind: input, shape index: {}]
  %s3 = inlined_call_operand.vmem [shape: f32[128,128], index: 3, kind: output, shape index: {}]
  %s4 = sld [smem:[#allocation0]]
  $region30: #{transformer_causal_forward.11} parent=0
    _
  %s6 = ssub.s32 1, %s4
  %s7 = scalar_select 0, %s6, %s4
  // Predicated region
  $region2: #{transformer_causal_forward.11} parent=0 // pred_check
    _
  $region3: #{transformer_causal_forward.11} parent=0 // pred_check_branch
    %9 = sbr.rel (0) target = $region5
  $region4: #{transformer_causal_forward.11} parent=0 // pred_region
    _
  $region5: #{transformer_causal_forward.11} parent=0 // pred_fallthru
    _
  // Predicated region
  $region6: #{transformer_causal_forward.11} parent=0 // pred_check
    _
  $region7: #{transformer_causal_forward.11} parent=0 // pred_check_branch
    %11 = sbr.rel (0) target = $region9
  $region8: #{transformer_causal_forward.11} parent=0 // pred_region
    _
  $region9: #{transformer_causal_forward.11} parent=0 // pred_fallthru
    _
  // Predicated region
  $region10: #{transformer_causal_forward.11} parent=0 // pred_check
    _
  $region11: #{transformer_causal_forward.11} parent=0 // pred_check_branch
    %13 = sbr.rel (0) target = $region13
  $region12: #{transformer_causal_forward.11} parent=0 // pred_region
    _
  $region13: #{transformer_causal_forward.11} parent=0 // pred_fallthru
    _
  %p14 = scmp.eq.s32.totalorder 0, 0
  // Predicated region
  $region14: #{transformer_causal_forward.11} parent=0 // pred_check
    %p15 = pneg %p14
  $region15: #{transformer_causal_forward.11} parent=0 // pred_check_branch
    %17 = sbr.rel (%p15) target = $region17
  $region16: #{transformer_causal_forward.11} parent=0 // pred_region
    %18 = vst [vmem:[#allocation2] sm:$0xff] 0.0
    %19 = vst [vmem:[#allocation2 + $0x8] sm:$0xff] 0.0
    %20 = vst [vmem:[#allocation2 + $0x10] sm:$0xff] 0.0
    %21 = vst [vmem:[#allocation2 + $0x18] sm:$0xff] 0.0
    %22 = vst [vmem:[#allocation2 + $0x20] sm:$0xff] 0.0
    %23 = vst [vmem:[#allocation2 + $0x28] sm:$0xff] 0.0
    %24 = vst [vmem:[#allocation2 + $0x30] sm:$0xff] 0.0
    %25 = vst [vmem:[#allocation2 + $0x38] sm:$0xff] 0.0
    %26 = vst [vmem:[#allocation2 + $0x40] sm:$0xff] 0.0
    %27 = vst [vmem:[#allocation2 + $0x48] sm:$0xff] 0.0
    %28 = vst [vmem:[#allocation2 + $0x50] sm:$0xff] 0.0
    %29 = vst [vmem:[#allocation2 + $0x58] sm:$0xff] 0.0
    %30 = vst [vmem:[#allocation2 + $0x60] sm:$0xff] 0.0
    %31 = vst [vmem:[#allocation2 + $0x68] sm:$0xff] 0.0
    %32 = vst [vmem:[#allocation2 + $0x70] sm:$0xff] 0.0
    %33 = vst [vmem:[#allocation2 + $0x78] sm:$0xff] 0.0
  $region17: #{transformer_causal_forward.11} parent=0 // pred_fallthru
    _
  %v34 = vld [vmem:[#allocation2] sm:$0xff]
  %v35 = vld [vmem:[#allocation2 + $0x8] sm:$0xff]
  %v36 = vld [vmem:[#allocation2 + $0x10] sm:$0xff]
  %v37 = vld [vmem:[#allocation2 + $0x18] sm:$0xff]
  %v38 = vld [vmem:[#allocation2 + $0x20] sm:$0xff]
  %v39 = vld [vmem:[#allocation2 + $0x28] sm:$0xff]
  %v40 = vld [vmem:[#allocation2 + $0x30] sm:$0xff]
  %v41 = vld [vmem:[#allocation2 + $0x38] sm:$0xff]
  %v42 = vld [vmem:[#allocation2 + $0x40] sm:$0xff]
  %v43 = vld [vmem:[#allocation2 + $0x48] sm:$0xff]
  %v44 = vld [vmem:[#allocation2 + $0x50] sm:$0xff]
  %v45 = vld [vmem:[#allocation2 + $0x58] sm:$0xff]
  %v46 = vld [vmem:[#allocation2 + $0x60] sm:$0xff]
  %v47 = vld [vmem:[#allocation2 + $0x68] sm:$0xff]
  %v48 = vld [vmem:[#allocation2 + $0x70] sm:$0xff]
  %v49 = vld [vmem:[#allocation2 + $0x78] sm:$0xff]
  %v50 = vld [vmem:[%s0] sm:$0xf]
  %v51 = vld [vmem:[%s0 + $0x4] sm:$0xf]
  %v52 = vld [vmem:[%s0 + $0x8] sm:$0xf]
  %v53 = vld [vmem:[%s0 + $0xc] sm:$0xf]
  %v54 = vld [vmem:[%s0 + $0x10] sm:$0xf]
  %v55 = vld [vmem:[%s0 + $0x14] sm:$0xf]
  %v56 = vld [vmem:[%s0 + $0x18] sm:$0xf]
  %v57 = vld [vmem:[%s0 + $0x1c] sm:$0xf]
  %v58 = vld [vmem:[%s0 + $0x20] sm:$0xf]
  %v59 = vld [vmem:[%s0 + $0x24] sm:$0xf]
  %v60 = vld [vmem:[%s0 + $0x28] sm:$0xf]
  %v61 = vld [vmem:[%s0 + $0x2c] sm:$0xf]
  %v62 = vld [vmem:[%s0 + $0x30] sm:$0xf]
  %v63 = vld [vmem:[%s0 + $0x34] sm:$0xf]
  %v64 = vld [vmem:[%s0 + $0x38] sm:$0xf]
  %v65 = vld [vmem:[%s0 + $0x3c] sm:$0xf]
  %v66 = vld [vmem:[%s1] sm:$0xf]
  %v67 = vld [vmem:[%s1 + $0x4] sm:$0xf]
  %v68 = vld [vmem:[%s1 + $0x8] sm:$0xf]
  %v69 = vld [vmem:[%s1 + $0xc] sm:$0xf]
  %v70 = vld [vmem:[%s1 + $0x10] sm:$0xf]
  %v71 = vld [vmem:[%s1 + $0x14] sm:$0xf]
  %v72 = vld [vmem:[%s1 + $0x18] sm:$0xf]
  %v73 = vld [vmem:[%s1 + $0x1c] sm:$0xf]
  %v74 = vld [vmem:[%s1 + $0x20] sm:$0xf]
  %v75 = vld [vmem:[%s1 + $0x24] sm:$0xf]
  %v76 = vld [vmem:[%s1 + $0x28] sm:$0xf]
  %v77 = vld [vmem:[%s1 + $0x2c] sm:$0xf]
  %v78 = vld [vmem:[%s1 + $0x30] sm:$0xf]
  %v79 = vld [vmem:[%s1 + $0x34] sm:$0xf]
  %v80 = vld [vmem:[%s1 + $0x38] sm:$0xf]
  %v81 = vld [vmem:[%s1 + $0x3c] sm:$0xf]
  %v98 = vunpack.c.l.b16 %v50
  %v99 = vunpack.c.l.b16 %v51
  %v100 = vunpack.c.l.b16 %v52
  %v101 = vunpack.c.l.b16 %v53
  %v102 = vunpack.c.l.b16 %v54
  %v103 = vunpack.c.l.b16 %v55
  %v104 = vunpack.c.l.b16 %v56
  %v105 = vunpack.c.l.b16 %v57
  %v106 = vunpack.c.l.b16 %v58
  %v107 = vunpack.c.l.b16 %v59
  %v108 = vunpack.c.l.b16 %v60
  %v109 = vunpack.c.l.b16 %v61
  %v110 = vunpack.c.l.b16 %v62
  %v111 = vunpack.c.l.b16 %v63
  %v112 = vunpack.c.l.b16 %v64
  %v113 = vunpack.c.l.b16 %v65
  %v114 = vpack.c.b16 %v99, %v98
  %v115 = vpack.c.b16 %v101, %v100
  %v116 = vpack.c.b16 %v103, %v102
  %v117 = vpack.c.b16 %v105, %v104
  %v118 = vpack.c.b16 %v107, %v106
  %v119 = vpack.c.b16 %v109, %v108
  %v120 = vpack.c.b16 %v111, %v110
  %v121 = vpack.c.b16 %v113, %v112
  %v146 = vunpack.c.l.b16 %v66
  %v147 = vunpack.c.l.b16 %v67
  %v148 = vunpack.c.l.b16 %v68
  %v149 = vunpack.c.l.b16 %v69
  %v150 = vunpack.c.l.b16 %v70
  %v151 = vunpack.c.l.b16 %v71
  %v152 = vunpack.c.l.b16 %v72
  %v153 = vunpack.c.l.b16 %v73
  %v154 = vunpack.c.l.b16 %v74
  %v155 = vunpack.c.l.b16 %v75
  %v156 = vunpack.c.l.b16 %v76
  %v157 = vunpack.c.l.b16 %v77
  %v158 = vunpack.c.l.b16 %v78
  %v159 = vunpack.c.l.b16 %v79
  %v160 = vunpack.c.l.b16 %v80
  %v161 = vunpack.c.l.b16 %v81
  %v162 = vpack.c.b16 %v147, %v146
  %v163 = vpack.c.b16 %v149, %v148
  %v164 = vpack.c.b16 %v151, %v150
  %v165 = vpack.c.b16 %v153, %v152
  %v166 = vpack.c.b16 %v155, %v154
  %v167 = vpack.c.b16 %v157, %v156
  %v168 = vpack.c.b16 %v159, %v158
  %v169 = vpack.c.b16 %v161, %v160
  %178 = vmatpush.bf16.msra.mxu0 %v169
  %179 = vmatpush.bf16.msra.mxu0 %v168
  %180 = vmatpush.bf16.msra.mxu0 %v167
  %181 = vmatpush.bf16.msra.mxu0 %v166
  %182 = vmatpush.bf16.msra.mxu0 %v165
  %183 = vmatpush.bf16.msra.mxu0 %v164
  %184 = vmatpush.bf16.msra.mxu0 %v163
  %185 = vmatpush.bf16.msra.mxu0 %v162
  %186 = vmatmul.bf16.gmra.mxu0 %v114
  %v187 = vpop.f32.mrf.mxu0
  %v188 = vadd.f32 0.0, %v187
  %v189 = vpop.f32.mrf.mxu0
  %v190 = vadd.f32 0.0, %v189
  %191 = vmatmul.bf16.gmra.mxu0 %v115
  %v192 = vpop.f32.mrf.mxu0
  %v193 = vadd.f32 0.0, %v192
  %v194 = vpop.f32.mrf.mxu0
  %v195 = vadd.f32 0.0, %v194
  %196 = vmatmul.bf16.gmra.mxu0 %v116
  %v197 = vpop.f32.mrf.mxu0
  %v198 = vadd.f32 0.0, %v197
  %v199 = vpop.f32.mrf.mxu0
  %v200 = vadd.f32 0.0, %v199
  %201 = vmatmul.bf16.gmra.mxu0 %v117
  %v202 = vpop.f32.mrf.mxu0
  %v203 = vadd.f32 0.0, %v202
  %v204 = vpop.f32.mrf.mxu0
  %v205 = vadd.f32 0.0, %v204
  %206 = vmatmul.bf16.gmra.mxu0 %v118
  %v207 = vpop.f32.mrf.mxu0
  %v208 = vadd.f32 0.0, %v207
  %v209 = vpop.f32.mrf.mxu0
  %v210 = vadd.f32 0.0, %v209
  %211 = vmatmul.bf16.gmra.mxu0 %v119
  %v212 = vpop.f32.mrf.mxu0
  %v213 = vadd.f32 0.0, %v212
  %v214 = vpop.f32.mrf.mxu0
  %v215 = vadd.f32 0.0, %v214
  %216 = vmatmul.bf16.gmra.mxu0 %v120
  %v217 = vpop.f32.mrf.mxu0
  %v218 = vadd.f32 0.0, %v217
  %v219 = vpop.f32.mrf.mxu0
  %v220 = vadd.f32 0.0, %v219
  %221 = vmatmul.bf16.gmra.mxu0 %v121
  %v222 = vpop.f32.mrf.mxu0
  %v223 = vadd.f32 0.0, %v222
  %v224 = vpop.f32.mrf.mxu0
  %v225 = vadd.f32 0.0, %v224
  %226 = vdwg.mxu0
  %v227 = vadd.f32 %v34, %v188
  %v228 = vadd.f32 %v35, %v190
  %v229 = vadd.f32 %v36, %v193
  %v230 = vadd.f32 %v37, %v195
  %v231 = vadd.f32 %v38, %v198
  %v232 = vadd.f32 %v39, %v200
  %v233 = vadd.f32 %v40, %v203
  %v234 = vadd.f32 %v41, %v205
  %v235 = vadd.f32 %v42, %v208
  %v236 = vadd.f32 %v43, %v210
  %v237 = vadd.f32 %v44, %v213
  %v238 = vadd.f32 %v45, %v215
  %v239 = vadd.f32 %v46, %v218
  %v240 = vadd.f32 %v47, %v220
  %v241 = vadd.f32 %v48, %v223
  %v242 = vadd.f32 %v49, %v225
  %243 = vst [vmem:[#allocation2] sm:$0xff] %v227
  %244 = vst [vmem:[#allocation2 + $0x8] sm:$0xff] %v228
  %245 = vst [vmem:[#allocation2 + $0x10] sm:$0xff] %v229
  %246 = vst [vmem:[#allocation2 + $0x18] sm:$0xff] %v230
  %247 = vst [vmem:[#allocation2 + $0x20] sm:$0xff] %v231
  %248 = vst [vmem:[#allocation2 + $0x28] sm:$0xff] %v232
  %249 = vst [vmem:[#allocation2 + $0x30] sm:$0xff] %v233
  %250 = vst [vmem:[#allocation2 + $0x38] sm:$0xff] %v234
  %251 = vst [vmem:[#allocation2 + $0x40] sm:$0xff] %v235
  %252 = vst [vmem:[#allocation2 + $0x48] sm:$0xff] %v236
  %253 = vst [vmem:[#allocation2 + $0x50] sm:$0xff] %v237
  %254 = vst [vmem:[#allocation2 + $0x58] sm:$0xff] %v238
  %255 = vst [vmem:[#allocation2 + $0x60] sm:$0xff] %v239
  %256 = vst [vmem:[#allocation2 + $0x68] sm:$0xff] %v240
  %257 = vst [vmem:[#allocation2 + $0x70] sm:$0xff] %v241
  %258 = vst [vmem:[#allocation2 + $0x78] sm:$0xff] %v242
  // Predicated region
  $region18: #{transformer_causal_forward.11} parent=0 // pred_check
    %p259 = pneg %p14
  $region19: #{transformer_causal_forward.11} parent=0 // pred_check_branch
    %261 = sbr.rel (%p259) target = $region21
  $region20: #{transformer_causal_forward.11} parent=0 // pred_region
    %v262 = vld [vmem:[#allocation2] sm:$0xff]
    %v263 = vld [vmem:[#allocation2 + $0x8] sm:$0xff]
    %v264 = vld [vmem:[#allocation2 + $0x10] sm:$0xff]
    %v265 = vld [vmem:[#allocation2 + $0x18] sm:$0xff]
    %v266 = vld [vmem:[#allocation2 + $0x20] sm:$0xff]
    %v267 = vld [vmem:[#allocation2 + $0x28] sm:$0xff]
    %v268 = vld [vmem:[#allocation2 + $0x30] sm:$0xff]
    %v269 = vld [vmem:[#allocation2 + $0x38] sm:$0xff]
    %v270 = vld [vmem:[#allocation2 + $0x40] sm:$0xff]
    %v271 = vld [vmem:[#allocation2 + $0x48] sm:$0xff]
    %v272 = vld [vmem:[#allocation2 + $0x50] sm:$0xff]
    %v273 = vld [vmem:[#allocation2 + $0x58] sm:$0xff]
    %v274 = vld [vmem:[#allocation2 + $0x60] sm:$0xff]
    %v275 = vld [vmem:[#allocation2 + $0x68] sm:$0xff]
    %v276 = vld [vmem:[#allocation2 + $0x70] sm:$0xff]
    %v277 = vld [vmem:[#allocation2 + $0x78] sm:$0xff]
    %v278 = vld [vmem:[%s2] sm:$0x1]
    %v280 = vperm.slane %v278, 0
    %v282 = vadd.f32 %v262, %v280
    %v283 = vadd.f32 %v263, %v280
    %v284 = vadd.f32 %v264, %v280
    %v285 = vadd.f32 %v265, %v280
    %v286 = vadd.f32 %v266, %v280
    %v287 = vadd.f32 %v267, %v280
    %v288 = vadd.f32 %v268, %v280
    %v289 = vadd.f32 %v269, %v280
    %v290 = vadd.f32 %v270, %v280
    %v291 = vadd.f32 %v271, %v280
    %v292 = vadd.f32 %v272, %v280
    %v293 = vadd.f32 %v273, %v280
    %v294 = vadd.f32 %v274, %v280
    %v295 = vadd.f32 %v275, %v280
    %v296 = vadd.f32 %v276, %v280
    %v297 = vadd.f32 %v277, %v280
    %298 = vst [vmem:[%s3] sm:$0xff] %v282
    %299 = vst [vmem:[%s3 + $0x8] sm:$0xff] %v283
    %300 = vst [vmem:[%s3 + $0x10] sm:$0xff] %v284
    %301 = vst [vmem:[%s3 + $0x18] sm:$0xff] %v285
    %302 = vst [vmem:[%s3 + $0x20] sm:$0xff] %v286
    %303 = vst [vmem:[%s3 + $0x28] sm:$0xff] %v287
    %304 = vst [vmem:[%s3 + $0x30] sm:$0xff] %v288
    %305 = vst [vmem:[%s3 + $0x38] sm:$0xff] %v289
    %306 = vst [vmem:[%s3 + $0x40] sm:$0xff] %v290
    %307 = vst [vmem:[%s3 + $0x48] sm:$0xff] %v291
    %308 = vst [vmem:[%s3 + $0x50] sm:$0xff] %v292
    %309 = vst [vmem:[%s3 + $0x58] sm:$0xff] %v293
    %310 = vst [vmem:[%s3 + $0x60] sm:$0xff] %v294
    %311 = vst [vmem:[%s3 + $0x68] sm:$0xff] %v295
    %312 = vst [vmem:[%s3 + $0x70] sm:$0xff] %v296
    %313 = vst [vmem:[%s3 + $0x78] sm:$0xff] %v297
  $region21: #{transformer_causal_forward.11} parent=0 // pred_fallthru
    _
  // Predicated region
  $region22: #{transformer_causal_forward.11} parent=0 // pred_check
    _
  $region23: #{transformer_causal_forward.11} parent=0 // pred_check_branch
    %315 = sbr.rel (0) target = $region25
  $region24: #{transformer_causal_forward.11} parent=0 // pred_region
    _
  $region25: #{transformer_causal_forward.11} parent=0 // pred_fallthru
    _
  // Predicated region
  $region26: #{transformer_causal_forward.11} parent=0 // pred_check
    _
  $region27: #{transformer_causal_forward.11} parent=0 // pred_check_branch
    %317 = sbr.rel (0) target = $region29
  $region28: #{transformer_causal_forward.11} parent=0 // pred_region
    _
  $region29: #{transformer_causal_forward.11} parent=0 // pred_fallthru
    _

// kernel: transformer_causal_forward.7
$region0: #{transformer_causal_forward.7}
  #allocation0 [shape = 'u32[]', space=smem, size = 0x4, offset = 0x4, fixed_abs, tag = 'smem constant byte address 0x4 - core index']
  #allocation1 [shape = 'u32[72,128]{1,0:T(1,128)}', space=vmem, size = 0x9000, scoped, tag = 'internal scratch']
  #allocation2 [shape = 'bf16[2,8,32]{2,1,0:T(8,128)(2,1)}', space=vmem, size = 0x1000, scoped, tag = 'scratch operand']
  #allocation3 [shape = 'f32[8,32]{1,0:T(8,128)}', space=vmem, size = 0x1000, scoped, tag = 'scratch operand']
  #allocation4 [shape = 's32[1]{0}', space=sflag, size = 0x4, scoped, tag = 'scoped memory for transformer_causal_forward.7']
  #allocation5 [shape = 's32[1]{0:T(128)S(6)}', space=smem, size = 0x200, scoped, tag = 'prefetched SMEM operand 0']
  %s0 = inlined_call_operand.<no memory space> [shape: s32[1], index: 0, kind: input, shape index: {}]
  %s1 = inlined_call_operand.vmem [shape: bf16[2,8,32], index: 1, kind: input, shape index: {}, may-alias: {1,2}]
  %s2 = inlined_call_operand.vmem [shape: bf16[2,8,32], index: 2, kind: input, shape index: {}, may-alias: {1,2}]
  %s3 = inlined_call_operand.vmem [shape: bf16[2,32,16], index: 3, kind: input, shape index: {}]
  %s4 = inlined_call_operand.vmem [shape: f32[2,1,16], index: 4, kind: input, shape index: {}]
  %s5 = inlined_call_operand.vmem [shape: bf16[2,32,32], index: 5, kind: input, shape index: {}]
  %s6 = inlined_call_operand.vmem [shape: f32[2,1,32], index: 6, kind: input, shape index: {}]
  %s7 = inlined_call_operand.vmem [shape: bf16[2,16,32], index: 7, kind: input, shape index: {}]
  %s8 = inlined_call_operand.vmem [shape: f32[1,32], index: 8, kind: input, shape index: {}]
  %s9 = inlined_call_operand.vmem [shape: f32[1,32], index: 9, kind: input, shape index: {}]
  %s10 = inlined_call_operand.vmem [shape: f32[1,32], index: 10, kind: input, shape index: {}]
  %s11 = inlined_call_operand.vmem [shape: bf16[2,8,32], index: 11, kind: output, shape index: {}]
  %s12 = sld [smem:[#allocation0]]
  $region91: #{transformer_causal_forward.7} parent=0
    _
  %s14 = ssub.s32 1, %s12
  %s15 = scalar_select 0, %s14, %s12
  %16 = sst [smem:[#allocation5]] %s0
  loop: start=0, step=1, limit=4
  $region2: #{transformer_causal_forward.7} parent=0 // loop_pre_header
    _
  $region3: #{transformer_causal_forward.7} parent=0 // loop_header
    %s18 = sphi 0, %s22
    %p19 = scmp.ge.s32.totalorder %s18, 4
    %s25 = sphi 0, %s37
    %s26 = sphi 0, %s33
    %s27 = sphi 0, %s25
    %s28 = sphi 0, %s26
    %s29 = sphi 0, %s27
    %s30 = sphi 0, %s28
    %s40 = sphi 0, %s42
    %s43 = sphi 0, %s40
    %s44 = sphi 0, %s43
    %s60 = sphi 0, %s44
    %s68 = sphi 0, %s70
    %s71 = sphi 0, %s68
    %s72 = sphi 0, %s71
    %s88 = sphi 0, %s72
    %s92 = sphi 0, %s92
    %s94 = sphi 0, %s92
    %s95 = sphi 0, %s94
    %s109 = sphi 0, %s95
    %s113 = sphi 0, %s113
    %s115 = sphi 0, %s113
    %s116 = sphi 0, %s115
    %s130 = sphi 0, %s116
    %s134 = sphi 0, %s134
    %s136 = sphi 0, %s134
    %s137 = sphi 0, %s136
    %s151 = sphi 0, %s137
    %s155 = sphi 0, %s155
    %s157 = sphi 0, %s155
    %s158 = sphi 0, %s157
    %s172 = sphi 0, %s158
    %s176 = sphi 0, %s176
    %s178 = sphi 0, %s176
    %s179 = sphi 0, %s178
    %s193 = sphi 0, %s179
    %s197 = sphi 0, %s197
    %s199 = sphi 0, %s197
    %s200 = sphi 0, %s199
    %s214 = sphi 0, %s200
    %s218 = sphi 0, %s218
    %s220 = sphi 0, %s218
    %s221 = sphi 0, %s220
    %s235 = sphi 0, %s221
    %s239 = sphi 0, %s239
    %s241 = sphi 0, %s239
    %s242 = sphi 0, %s241
    %s256 = sphi 0, %s242
    %s264 = sphi 0, %s266
    %s267 = sphi 0, %s264
    %s268 = sphi 0, %s267
    %s284 = sphi 0, %s268
  $region4: #{transformer_causal_forward.7} parent=0 // loop_header_branch
    %21 = sbr.rel (%p19) target = $region8
  $region5: #{transformer_causal_forward.7} parent=0 // loop_body
    %s23 = ssub.s32 %s18, 1
    %s24 = ssub.s32 %s18, 2
    %s31 = sadd.s32 1, %s26
    %p32 = scmp.ge.s32.totalorder %s31, 1
    %s33 = scalar_select %p32, 0, %s31
    %s34 = sadd.s32 1, %s25
    %s35 = scalar_select %p32, %s34, %s25
    %p36 = scmp.ge.s32.totalorder %s35, 2
    %s37 = scalar_select %p36, 0, %s35
    %s38 = ssub.s32 %s25, %s37
    %p39 = scmp.eq.s32.totalorder %s38, 0
    %s41 = sadd.s32 %s40, 1
    %s42 = scalar_select %p39, %s40, %s41
    %p45 = pneg %p39
    %p46 = scmp.eq.s32.totalorder %s18, 1
    %p47 = por %p45, %p46
    %p48 = scmp.ne.s32.totalorder %s40, %s43
    %p49 = scmp.eq.s32.totalorder %s18, 0
    %p50 = por %p48, %p49
    %p51 = scmp.ne.s32.totalorder %s40, %s43
    %p52 = scmp.eq.s32.totalorder %s23, 1
    %p53 = por %p51, %p52
    %p54 = scmp.ne.s32.totalorder %s43, %s44
    %p55 = scmp.eq.s32.totalorder %s23, 0
    %p56 = por %p54, %p55
    %p57 = scmp.ne.s32.totalorder %s43, %s44
    %p58 = scmp.eq.s32.totalorder %s24, 1
    %p59 = por %p57, %p58
    %p61 = scmp.ne.s32.totalorder %s44, %s60
    %p62 = scmp.eq.s32.totalorder %s24, 0
    %p63 = por %p61, %p62
    %s64 = ssub.s32 %s25, %s37
    %s65 = ssub.s32 %s26, %s33
    %s66 = sor.u32 %s64, %s65
    %p67 = scmp.eq.s32.totalorder %s66, 0
    %s69 = sadd.s32 %s68, 1
    %s70 = scalar_select %p67, %s68, %s69
    %p73 = pneg %p67
    %p74 = scmp.eq.s32.totalorder %s18, 1
    %p75 = por %p73, %p74
    %p76 = scmp.ne.s32.totalorder %s68, %s71
    %p77 = scmp.eq.s32.totalorder %s18, 0
    %p78 = por %p76, %p77
    %p79 = scmp.ne.s32.totalorder %s68, %s71
    %p80 = scmp.eq.s32.totalorder %s23, 1
    %p81 = por %p79, %p80
    %p82 = scmp.ne.s32.totalorder %s71, %s72
    %p83 = scmp.eq.s32.totalorder %s23, 0
    %p84 = por %p82, %p83
    %p85 = scmp.ne.s32.totalorder %s71, %s72
    %p86 = scmp.eq.s32.totalorder %s24, 1
    %p87 = por %p85, %p86
    %p89 = scmp.ne.s32.totalorder %s72, %s88
    %p90 = scmp.eq.s32.totalorder %s24, 0
    %p91 = por %p89, %p90
    %s93 = sadd.s32 %s92, 1
    %p96 = scmp.eq.s32.totalorder %s18, 1
    %p97 = scmp.ne.s32.totalorder %s92, %s94
    %p98 = scmp.eq.s32.totalorder %s18, 0
    %p99 = por %p97, %p98
    %p100 = scmp.ne.s32.totalorder %s92, %s94
    %p101 = scmp.eq.s32.totalorder %s23, 1
    %p102 = por %p100, %p101
    %p103 = scmp.ne.s32.totalorder %s94, %s95
    %p104 = scmp.eq.s32.totalorder %s23, 0
    %p105 = por %p103, %p104
    %p106 = scmp.ne.s32.totalorder %s94, %s95
    %p107 = scmp.eq.s32.totalorder %s24, 1
    %p108 = por %p106, %p107
    %p110 = scmp.ne.s32.totalorder %s95, %s109
    %p111 = scmp.eq.s32.totalorder %s24, 0
    %p112 = por %p110, %p111
    %s114 = sadd.s32 %s113, 1
    %p117 = scmp.eq.s32.totalorder %s18, 1
    %p118 = scmp.ne.s32.totalorder %s113, %s115
    %p119 = scmp.eq.s32.totalorder %s18, 0
    %p120 = por %p118, %p119
    %p121 = scmp.ne.s32.totalorder %s113, %s115
    %p122 = scmp.eq.s32.totalorder %s23, 1
    %p123 = por %p121, %p122
    %p124 = scmp.ne.s32.totalorder %s115, %s116
    %p125 = scmp.eq.s32.totalorder %s23, 0
    %p126 = por %p124, %p125
    %p127 = scmp.ne.s32.totalorder %s115, %s116
    %p128 = scmp.eq.s32.totalorder %s24, 1
    %p129 = por %p127, %p128
    %p131 = scmp.ne.s32.totalorder %s116, %s130
    %p132 = scmp.eq.s32.totalorder %s24, 0
    %p133 = por %p131, %p132
    %s135 = sadd.s32 %s134, 1
    %p138 = scmp.eq.s32.totalorder %s18, 1
    %p139 = scmp.ne.s32.totalorder %s134, %s136
    %p140 = scmp.eq.s32.totalorder %s18, 0
    %p141 = por %p139, %p140
    %p142 = scmp.ne.s32.totalorder %s134, %s136
    %p143 = scmp.eq.s32.totalorder %s23, 1
    %p144 = por %p142, %p143
    %p145 = scmp.ne.s32.totalorder %s136, %s137
    %p146 = scmp.eq.s32.totalorder %s23, 0
    %p147 = por %p145, %p146
    %p148 = scmp.ne.s32.totalorder %s136, %s137
    %p149 = scmp.eq.s32.totalorder %s24, 1
    %p150 = por %p148, %p149
    %p152 = scmp.ne.s32.totalorder %s137, %s151
    %p153 = scmp.eq.s32.totalorder %s24, 0
    %p154 = por %p152, %p153
    %s156 = sadd.s32 %s155, 1
    %p159 = scmp.eq.s32.totalorder %s18, 1
    %p160 = scmp.ne.s32.totalorder %s155, %s157
    %p161 = scmp.eq.s32.totalorder %s18, 0
    %p162 = por %p160, %p161
    %p163 = scmp.ne.s32.totalorder %s155, %s157
    %p164 = scmp.eq.s32.totalorder %s23, 1
    %p165 = por %p163, %p164
    %p166 = scmp.ne.s32.totalorder %s157, %s158
    %p167 = scmp.eq.s32.totalorder %s23, 0
    %p168 = por %p166, %p167
    %p169 = scmp.ne.s32.totalorder %s157, %s158
    %p170 = scmp.eq.s32.totalorder %s24, 1
    %p171 = por %p169, %p170
    %p173 = scmp.ne.s32.totalorder %s158, %s172
    %p174 = scmp.eq.s32.totalorder %s24, 0
    %p175 = por %p173, %p174
    %s177 = sadd.s32 %s176, 1
    %p180 = scmp.eq.s32.totalorder %s18, 1
    %p181 = scmp.ne.s32.totalorder %s176, %s178
    %p182 = scmp.eq.s32.totalorder %s18, 0
    %p183 = por %p181, %p182
    %p184 = scmp.ne.s32.totalorder %s176, %s178
    %p185 = scmp.eq.s32.totalorder %s23, 1
    %p186 = por %p184, %p185
    %p187 = scmp.ne.s32.totalorder %s178, %s179
    %p188 = scmp.eq.s32.totalorder %s23, 0
    %p189 = por %p187, %p188
    %p190 = scmp.ne.s32.totalorder %s178, %s179
    %p191 = scmp.eq.s32.totalorder %s24, 1
    %p192 = por %p190, %p191
    %p194 = scmp.ne.s32.totalorder %s179, %s193
    %p195 = scmp.eq.s32.totalorder %s24, 0
    %p196 = por %p194, %p195
    %s198 = sadd.s32 %s197, 1
    %p201 = scmp.eq.s32.totalorder %s18, 1
    %p202 = scmp.ne.s32.totalorder %s197, %s199
    %p203 = scmp.eq.s32.totalorder %s18, 0
    %p204 = por %p202, %p203
    %p205 = scmp.ne.s32.totalorder %s197, %s199
    %p206 = scmp.eq.s32.totalorder %s23, 1
    %p207 = por %p205, %p206
    %p208 = scmp.ne.s32.totalorder %s199, %s200
    %p209 = scmp.eq.s32.totalorder %s23, 0
    %p210 = por %p208, %p209
    %p211 = scmp.ne.s32.totalorder %s199, %s200
    %p212 = scmp.eq.s32.totalorder %s24, 1
    %p213 = por %p211, %p212
    %p215 = scmp.ne.s32.totalorder %s200, %s214
    %p216 = scmp.eq.s32.totalorder %s24, 0
    %p217 = por %p215, %p216
    %s219 = sadd.s32 %s218, 1
    %p222 = scmp.eq.s32.totalorder %s18, 1
    %p223 = scmp.ne.s32.totalorder %s218, %s220
    %p224 = scmp.eq.s32.totalorder %s18, 0
    %p225 = por %p223, %p224
    %p226 = scmp.ne.s32.totalorder %s218, %s220
    %p227 = scmp.eq.s32.totalorder %s23, 1
    %p228 = por %p226, %p227
    %p229 = scmp.ne.s32.totalorder %s220, %s221
    %p230 = scmp.eq.s32.totalorder %s23, 0
    %p231 = por %p229, %p230
    %p232 = scmp.ne.s32.totalorder %s220, %s221
    %p233 = scmp.eq.s32.totalorder %s24, 1
    %p234 = por %p232, %p233
    %p236 = scmp.ne.s32.totalorder %s221, %s235
    %p237 = scmp.eq.s32.totalorder %s24, 0
    %p238 = por %p236, %p237
    %s240 = sadd.s32 %s239, 1
    %p243 = scmp.eq.s32.totalorder %s18, 1
    %p244 = scmp.ne.s32.totalorder %s239, %s241
    %p245 = scmp.eq.s32.totalorder %s18, 0
    %p246 = por %p244, %p245
    %p247 = scmp.ne.s32.totalorder %s239, %s241
    %p248 = scmp.eq.s32.totalorder %s23, 1
    %p249 = por %p247, %p248
    %p250 = scmp.ne.s32.totalorder %s241, %s242
    %p251 = scmp.eq.s32.totalorder %s23, 0
    %p252 = por %p250, %p251
    %p253 = scmp.ne.s32.totalorder %s241, %s242
    %p254 = scmp.eq.s32.totalorder %s24, 1
    %p255 = por %p253, %p254
    %p257 = scmp.ne.s32.totalorder %s242, %s256
    %p258 = scmp.eq.s32.totalorder %s24, 0
    %p259 = por %p257, %p258
    %s260 = ssub.s32 %s25, %s37
    %s261 = ssub.s32 %s26, %s33
    %s262 = sor.u32 %s260, %s261
    %p263 = scmp.eq.s32.totalorder %s262, 0
    %s265 = sadd.s32 %s264, 1
    %s266 = scalar_select %p263, %s264, %s265
    %p269 = pneg %p263
    %p270 = scmp.eq.s32.totalorder %s18, 1
    %p271 = por %p269, %p270
    %p272 = scmp.ne.s32.totalorder %s264, %s267
    %p273 = scmp.eq.s32.totalorder %s18, 0
    %p274 = por %p272, %p273
    %p275 = scmp.ne.s32.totalorder %s264, %s267
    %p276 = scmp.eq.s32.totalorder %s23, 1
    %p277 = por %p275, %p276
    %p278 = scmp.ne.s32.totalorder %s267, %s268
    %p279 = scmp.eq.s32.totalorder %s23, 0
    %p280 = por %p278, %p279
    %p281 = scmp.ne.s32.totalorder %s267, %s268
    %p282 = scmp.eq.s32.totalorder %s24, 1
    %p283 = por %p281, %p282
    %p285 = scmp.ne.s32.totalorder %s268, %s284
    %p286 = scmp.eq.s32.totalorder %s24, 0
    %p287 = por %p285, %p286
    %p288 = scmp.le.s32.totalorder 1, %s18
    %p289 = scmp.lt.s32.totalorder %s18, 3
    %p290 = pnand %p288, %p289
    %p291 = pneg %p290
    // Predicated region
    $region9: #{transformer_causal_forward.7} parent=5 // pred_check
      _
    $region10: #{transformer_causal_forward.7} parent=5 // pred_check_branch
      %293 = sbr.rel (%p290) target = $region12
    $region11: #{transformer_causal_forward.7} parent=5 // pred_region
      %s294 = ssub.s32 %s18, 1
      // Predicated region
      $region13: #{transformer_causal_forward.7} parent=11 // pred_check
        %p295 = pneg %p105
      $region14: #{transformer_causal_forward.7} parent=11 // pred_check_branch
        %297 = sbr.rel (%p295) target = $region16
      $region15: #{transformer_causal_forward.7} parent=11 // pred_region
        _
      $region16: #{transformer_causal_forward.7} parent=11 // pred_fallthru
        _
      // Predicated region
      $region17: #{transformer_causal_forward.7} parent=11 // pred_check
        %p298 = pneg %p126
      $region18: #{transformer_causal_forward.7} parent=11 // pred_check_branch
        %300 = sbr.rel (%p298) target = $region20
      $region19: #{transformer_causal_forward.7} parent=11 // pred_region
        _
      $region20: #{transformer_causal_forward.7} parent=11 // pred_fallthru
        _
      // Predicated region
      $region21: #{transformer_causal_forward.7} parent=11 // pred_check
        %p301 = pneg %p147
      $region22: #{transformer_causal_forward.7} parent=11 // pred_check_branch
        %303 = sbr.rel (%p301) target = $region24
      $region23: #{transformer_causal_forward.7} parent=11 // pred_region
        _
      $region24: #{transformer_causal_forward.7} parent=11 // pred_fallthru
        _
      // Predicated region
      $region25: #{transformer_causal_forward.7} parent=11 // pred_check
        %p304 = pneg %p168
      $region26: #{transformer_causal_forward.7} parent=11 // pred_check_branch
        %306 = sbr.rel (%p304) target = $region28
      $region27: #{transformer_causal_forward.7} parent=11 // pred_region
        _
      $region28: #{transformer_causal_forward.7} parent=11 // pred_fallthru
        _
      // Predicated region
      $region29: #{transformer_causal_forward.7} parent=11 // pred_check
        %p307 = pneg %p189
      $region30: #{transformer_causal_forward.7} parent=11 // pred_check_branch
        %309 = sbr.rel (%p307) target = $region32
      $region31: #{transformer_causal_forward.7} parent=11 // pred_region
        _
      $region32: #{transformer_causal_forward.7} parent=11 // pred_fallthru
        _
      // Predicated region
      $region33: #{transformer_causal_forward.7} parent=11 // pred_check
        %p310 = pneg %p210
      $region34: #{transformer_causal_forward.7} parent=11 // pred_check_branch
        %312 = sbr.rel (%p310) target = $region36
      $region35: #{transformer_causal_forward.7} parent=11 // pred_region
        _
      $region36: #{transformer_causal_forward.7} parent=11 // pred_fallthru
        _
      // Predicated region
      $region37: #{transformer_causal_forward.7} parent=11 // pred_check
        %p313 = pneg %p231
      $region38: #{transformer_causal_forward.7} parent=11 // pred_check_branch
        %315 = sbr.rel (%p313) target = $region40
      $region39: #{transformer_causal_forward.7} parent=11 // pred_region
        _
      $region40: #{transformer_causal_forward.7} parent=11 // pred_fallthru
        _
      // Predicated region
      $region41: #{transformer_causal_forward.7} parent=11 // pred_check
        %p316 = pneg %p252
      $region42: #{transformer_causal_forward.7} parent=11 // pred_check_branch
        %318 = sbr.rel (%p316) target = $region44
      $region43: #{transformer_causal_forward.7} parent=11 // pred_region
        _
      $region44: #{transformer_causal_forward.7} parent=11 // pred_fallthru
        _
    $region12: #{transformer_causal_forward.7} parent=5 // pred_fallthru
      _
    %p319 = scmp.lt.s32.totalorder %s18, 2
    // Predicated region
    $region45: #{transformer_causal_forward.7} parent=5 // pred_check
      %p320 = pneg %p319
    $region46: #{transformer_causal_forward.7} parent=5 // pred_check_branch
      %322 = sbr.rel (%p320) target = $region48
    $region47: #{transformer_causal_forward.7} parent=5 // pred_region
      // Predicated region
      $region49: #{transformer_causal_forward.7} parent=47 // pred_check
        %p323 = pneg %p50
      $region50: #{transformer_causal_forward.7} parent=47 // pred_check_branch
        %325 = sbr.rel (%p323) target = $region52
      $region51: #{transformer_causal_forward.7} parent=47 // pred_region
        %p326 = scmp.lt.s32.totalorder %s25, 1
        %s327 = scalar_select %p326, %s25, 1
        %s328 = smul.addr %s327, 4
        %s329 = scalar_lea.vmem %s1, %s328
      $region52: #{transformer_causal_forward.7} parent=47 // pred_fallthru
        _
      // Predicated region
      $region53: #{transformer_causal_forward.7} parent=47 // pred_check
        %p330 = pneg %p78
      $region54: #{transformer_causal_forward.7} parent=47 // pred_check_branch
        %332 = sbr.rel (%p330) target = $region56
      $region55: #{transformer_causal_forward.7} parent=47 // pred_region
        %p333 = scmp.lt.s32.totalorder %s25, 1
        %s334 = scalar_select %p333, %s25, 1
        %p335 = scmp.lt.s32.totalorder %s26, 0
        %s336 = scalar_select %p335, %s26, 0
        %s337 = sadd.s32 %s336, %s334
        %s338 = smul.addr %s337, 4
        %s339 = scalar_lea.vmem %s2, %s338
      $region56: #{transformer_causal_forward.7} parent=47 // pred_fallthru
        _
    $region48: #{transformer_causal_forward.7} parent=5 // pred_fallthru
      _
    %p340 = scmp.le.s32.totalorder 1, %s18
    %p341 = scmp.lt.s32.totalorder %s18, 3
    %p342 = pnand %p340, %p341
    %p343 = pneg %p342
    // Predicated region
    $region57: #{transformer_causal_forward.7} parent=5 // pred_check
      _
    $region58: #{transformer_causal_forward.7} parent=5 // pred_check_branch
      %345 = sbr.rel (%p342) target = $region60
    $region59: #{transformer_causal_forward.7} parent=5 // pred_region
      %s346 = ssub.s32 %s18, 1
      %p347 = scmp.lt.s32.totalorder %s27, 1
      %s348 = scalar_select %p347, %s27, 1
      %s349 = smul.addr %s348, 4
      %s350 = scalar_lea.vmem %s1, %s349
      %p351 = pneg %p56
      %p352 = pneg %p53
      %p353 = scmp.lt.s32.totalorder %s27, 1
      %s354 = scalar_select %p353, %s27, 1
      %p355 = scmp.lt.s32.totalorder %s28, 0
      %s356 = scalar_select %p355, %s28, 0
      %s357 = sadd.s32 %s356, %s354
      %s358 = smul.addr %s357, 4
      %s359 = scalar_lea.vmem %s2, %s358
      %p360 = pneg %p84
      %p361 = pneg %p81
      %p362 = pneg %p105
      %p363 = pneg %p102
      %p364 = pneg %p126
      %p365 = pneg %p123
      %p366 = pneg %p147
      %p367 = pneg %p144
      %p368 = pneg %p168
      %p369 = pneg %p165
      %p370 = pneg %p189
      %p371 = pneg %p186
      %p372 = pneg %p210
      %p373 = pneg %p207
      %p374 = pneg %p231
      %p375 = pneg %p228
      %p376 = pneg %p252
      %p377 = pneg %p249
      %p378 = pneg %p280
      %p379 = pneg %p277
      %p380 = scmp.lt.s32.totalorder %s27, 1
      %s381 = scalar_select %p380, %s27, 1
      %p382 = scmp.lt.s32.totalorder %s28, 0
      %s383 = scalar_select %p382, %s28, 0
      %s384 = sadd.s32 %s383, %s381
      %s385 = smul.addr %s384, 4
      %s386 = scalar_lea.vmem %s11, %s385
      %p387 = scmp.lt.s32.totalorder %s27, 1
      %s388 = scalar_select %p387, %s27, 1
      %s389 = smul.addr %s388, 4
      %s390 = scalar_lea.vmem %s1, %s389
      %p391 = scmp.lt.s32.totalorder %s27, 1
      %s392 = scalar_select %p391, %s27, 1
      %p393 = scmp.lt.s32.totalorder %s28, 0
      %s394 = scalar_select %p393, %s28, 0
      %s395 = sadd.s32 %s394, %s392
      %s396 = smul.addr %s395, 4
      %s397 = scalar_lea.vmem %s2, %s396
      %p398 = scmp.lt.s32.totalorder %s27, 1
      %s399 = scalar_select %p398, %s27, 1
      %p400 = scmp.lt.s32.totalorder %s28, 0
      %s401 = scalar_select %p400, %s28, 0
      %s402 = sadd.s32 %s401, %s399
      %s403 = smul.addr %s402, 4
      %s404 = scalar_lea.vmem %s11, %s403
      %p406 = scmp.eq.s32.totalorder %s28, 0
      // Predicated region
      $region61: #{transformer_causal_forward.7} parent=59 // pred_check
        %p407 = pneg %p406
      $region62: #{transformer_causal_forward.7} parent=59 // pred_check_branch
        %409 = sbr.rel (%p407) target = $region64
      $region63: #{transformer_causal_forward.7} parent=59 // pred_region
        %v410 = vld [vmem:[%s390] sm:$0xf]
        loop: start=0, step=1, limit=2
        $region65: #{transformer_causal_forward.7} parent=63 // loop_pre_header
          _
        $region66: #{transformer_causal_forward.7} parent=63 // loop_header
          %s412 = sphi 0, %s416
          %p413 = scmp.ge.s32.totalorder %s412, 2
        $region67: #{transformer_causal_forward.7} parent=63 // loop_header_branch
          %415 = sbr.rel (%p413) target = $region71
        $region68: #{transformer_causal_forward.7} parent=63 // loop_body
          %s417 = smul.u32 %s412, 4
          %s418 = smul.addr %s417, 4
          %s419 = scalar_lea.vmem %s5, %s418
          %v420 = vld [vmem:[%s419] sm:$0xf]
          %v421 = vld [vmem:[%s419 + $0x4] sm:$0xf]
          %v422 = vld [vmem:[%s419 + $0x8] sm:$0xf]
          %v423 = vld [vmem:[%s419 + $0xc] sm:$0xf]
          %s424 = scalar_lea.vmem %s6, %s412
          %v425 = vld [vmem:[%s424] sm:$0x1]
          %v427 = vperm.slane %v425, 0
          %v433 = vunpack.c.l.b16 %v420
          %v434 = vunpack.c.l.b16 %v421
          %v435 = vunpack.c.l.b16 %v422
          %v436 = vunpack.c.l.b16 %v423
          %v437 = vpack.c.b16 %v434, %v433
          %v438 = vpack.c.b16 %v436, %v435
          %vm441 = vcmask 261120
          %v443 = vsel %vm441, %v410, 0
          %445 = vmatpush.bf16.msra.mxu0 0
          %446 = vmatpush.bf16.msra.mxu0 0
          %447 = vmatpush.bf16.msra.mxu0 0
          %448 = vmatpush.bf16.msra.mxu0 0
          %449 = vmatpush.bf16.msra.mxu0 0
          %450 = vmatpush.bf16.msra.mxu0 0
          %451 = vmatpush.bf16.msra.mxu0 %v438
          %452 = vmatpush.bf16.msra.mxu0 %v437
          %453 = vmatmul.bf16.gmra.mxu0 %v443
          %v454 = vpop.f32.mrf.mxu0
          %v455 = vadd.f32 %v427, %v454
          %v456 = vpop.f32.mrf.mxu0
          %457 = vdwg.mxu0
          %v458 = vpack.c.bf16 %v455, %v455
          %s459 = smul.addr %s412, 4
          %s460 = scalar_lea.vmem [#allocation2], %s459
          %vm461 = vcmask 257024
          %462 = vst.msk [vmem:[%s460] sm:$0xf] %vm461, %v458
        $region69: #{transformer_causal_forward.7} parent=63 // loop_footer
          %s416 = sadd.s32 1, %s412
        $region70: #{transformer_causal_forward.7} parent=63 // loop_footer_branch
          %411 = sbr.rel target = $region66
        $region71: #{transformer_causal_forward.7} parent=63 // loop_exit
          _
      $region64: #{transformer_causal_forward.7} parent=59 // pred_fallthru
        _
      %v463 = vld [vmem:[%s397] sm:$0xf]
      %s464 = smul.u32 %s28, 8
      %v465 = vlaneseq
      %v466 = vshrl.u32 %v465, 7
      %v467 = vstv %s464
      %v468 = vadd.s32 %v467, %v466
      %v469 = vlaneseq
      %v470 = vand.u32 %v469, 127
      %vm471 = vcmp.le.s32.totalorder %v470, %v468
      %s472 = sld [smem:[#allocation5]]
      %v473 = vstv %s472
      %vm474 = vcmp.lt.s32.totalorder %v470, %v473
      %vm475 = vmor %vm471, %vm474
      %vm476 = vcmask 261120
      %477 = vst.msk [vmem:[#allocation3] sm:$0xff] %vm476, 0.0
      loop: start=0, step=1, limit=2
      $region72: #{transformer_causal_forward.7} parent=59 // loop_pre_header
        _
      $region73: #{transformer_causal_forward.7} parent=59 // loop_header
        %s479 = sphi 0, %s483
        %p480 = scmp.ge.s32.totalorder %s479, 2
      $region74: #{transformer_causal_forward.7} parent=59 // loop_header_branch
        %482 = sbr.rel (%p480) target = $region78
      $region75: #{transformer_causal_forward.7} parent=59 // loop_body
        %s484 = smul.u32 %s479, 4
        %s485 = smul.addr %s484, 4
        %s486 = scalar_lea.vmem %s3, %s485
        %v487 = vld [vmem:[%s486] sm:$0xf]
        %v488 = vld [vmem:[%s486 + $0x4] sm:$0xf]
        %v489 = vld [vmem:[%s486 + $0x8] sm:$0xf]
        %v490 = vld [vmem:[%s486 + $0xc] sm:$0xf]
        %s491 = scalar_lea.vmem %s4, %s479
        %v492 = vld [vmem:[%s491] sm:$0x1]
        %v494 = vperm.slane %v492, 0
        %v500 = vunpack.c.l.b16 %v487
        %v501 = vunpack.c.l.b16 %v488
        %v502 = vunpack.c.l.b16 %v489
        %v503 = vunpack.c.l.b16 %v490
        %v504 = vpack.c.b16 %v501, %v500
        %v505 = vpack.c.b16 %v503, %v502
        %v509 = vsel %vm476, %v463, 0
        %511 = vmatpush.bf16.msra.mxu0 0
        %512 = vmatpush.bf16.msra.mxu0 0
        %513 = vmatpush.bf16.msra.mxu0 0
        %514 = vmatpush.bf16.msra.mxu0 0
        %515 = vmatpush.bf16.msra.mxu0 0
        %516 = vmatpush.bf16.msra.mxu0 0
        %517 = vmatpush.bf16.msra.mxu0 %v505
        %518 = vmatpush.bf16.msra.mxu0 %v504
        %519 = vmatmul.bf16.gmra.mxu0 %v509
        %v520 = vpop.f32.mrf.mxu0
        %v521 = vadd.f32 %v494, %v520
        %v522 = vpop.f32.mrf.mxu0
        %523 = vdwg.mxu0
        %s524 = smul.addr %s479, 4
        %s525 = scalar_lea.vmem [#allocation2], %s524
        %v526 = vld [vmem:[%s525] sm:$0xf]
        %v527 = vmul.f32 %v521, 0.25
        %v528 = vpack.c.bf16 %v527, %v527
        %vm529 = vcmask 130048
        %v531 = vsel %vm529, %v528, 0
        %v534 = vsel %vm529, %v526, 0
        %536 = vmatpush.bf16.xpose.msra.mxu0 0
        %537 = vmatpush.bf16.xpose.msra.mxu0 0
        %538 = vmatpush.bf16.xpose.msra.mxu0 0
        %539 = vmatpush.bf16.xpose.msra.mxu0 0
        %540 = vmatpush.bf16.xpose.msra.mxu0 0
        %541 = vmatpush.bf16.xpose.msra.mxu0 0
        %542 = vmatpush.bf16.xpose.msra.mxu0 0
        %543 = vmatpush.bf16.xpose.msra.mxu0 %v534
        %544 = vmatmul.bf16.gmra.mxu0 %v531
        %v545 = vpop.f32.mrf.mxu0
        %v546 = vadd.f32 0.0, %v545
        %v547 = vpop.f32.mrf.mxu0
        %548 = vdwg.mxu0
        %v549 = vsel %vm475, %v546, -inf
        %vm550 = vcmask 64512
        %v551 = vsel %vm550, %v549, -inf
        %552 = vmax.xlane.f32.xlu0 %v551
        %v553 = vpop.xlane.xlu0 %552
        %v554 = vsub.f32 %v549, %v553
        %v555 = vmul.f32 %v554, 1.442695
        %v556 = vpow.pop %v555
        %v557 = vsel %vm550, %v556, 0.0
        %558 = vadd.xlane.f32.xlu0 %v557
        %v559 = vpop.xlane.xlu0 %558
        %v560 = vrcp.pop %v559
        %v561 = vmul.f32 %v556, %v560
        %v562 = vpack.c.bf16 %v561, %v561
        %v564 = vunpack.c.l.b16 %v526
        %v565 = vpack.c.b16 %v564, %v564
        %566 = vrot.lane.b32.xlu0 %v565, 112
        %v567 = vpop.permute.xlu0 %566
        %v569 = vsel %vm550, %v562, 0
        %vm571 = vcmask 1043456
        %v573 = vsel %vm571, %v567, 0
        %575 = vmatpush.bf16.msra.mxu0 0
        %576 = vmatpush.bf16.msra.mxu0 0
        %577 = vmatpush.bf16.msra.mxu0 0
        %578 = vmatpush.bf16.msra.mxu0 0
        %579 = vmatpush.bf16.msra.mxu0 0
        %580 = vmatpush.bf16.msra.mxu0 0
        %581 = vmatpush.bf16.msra.mxu0 0
        %582 = vmatpush.bf16.msra.mxu0 %v573
        %583 = vmatmul.bf16.gmra.mxu0 %v569
        %v584 = vpop.f32.mrf.mxu0
        %v585 = vadd.f32 0.0, %v584
        %v586 = vpop.f32.mrf.mxu0
        %587 = vdwg.mxu0
        %v588 = vld [vmem:[#allocation3] sm:$0xff]
        %v589 = vpack.c.bf16 %v585, %v585
        %s590 = smul.u32 %s479, 2
        %s591 = smul.addr %s590, 4
        %s592 = scalar_lea.vmem %s7, %s591
        %v593 = vld [vmem:[%s592] sm:$0xf]
        %v594 = vld [vmem:[%s592 + $0x4] sm:$0xf]
        %v597 = vunpack.c.l.b16 %v593
        %v598 = vunpack.c.l.b16 %v594
        %v599 = vpack.c.b16 %v598, %v597
        %v602 = vsel %vm529, %v589, 0
        %604 = vmatpush.bf16.msra.mxu0 0
        %605 = vmatpush.bf16.msra.mxu0 0
        %606 = vmatpush.bf16.msra.mxu0 0
        %607 = vmatpush.bf16.msra.mxu0 0
        %608 = vmatpush.bf16.msra.mxu0 0
        %609 = vmatpush.bf16.msra.mxu0 0
        %610 = vmatpush.bf16.msra.mxu0 0
        %611 = vmatpush.bf16.msra.mxu0 %v599
        %612 = vmatmul.bf16.gmra.mxu0 %v602
        %v613 = vpop.f32.mrf.mxu0
        %v614 = vadd.f32 0.0, %v613
        %v615 = vpop.f32.mrf.mxu0
        %616 = vdwg.mxu0
        %v617 = vadd.f32 %v588, %v614
        %618 = vst.msk [vmem:[#allocation3] sm:$0xff] %vm476, %v617
      $region76: #{transformer_causal_forward.7} parent=59 // loop_footer
        %s483 = sadd.s32 1, %s479
      $region77: #{transformer_causal_forward.7} parent=59 // loop_footer_branch
        %478 = sbr.rel target = $region73
      $region78: #{transformer_causal_forward.7} parent=59 // loop_exit
        _
      %v619 = vld [vmem:[#allocation3] sm:$0xff]
      %v620 = vld [vmem:[%s8] sm:$0x1]
      %v622 = vperm.slane %v620, 0
      %v624 = vadd.f32 %v619, %v622
      %v625 = vunpack.c.l.bf16 %v463
      %v626 = vadd.f32 %v625, %v624
      %v627 = vld [vmem:[%s9] sm:$0x1]
      %v628 = vld [vmem:[%s10] sm:$0x1]
      %v629 = vsel %vm476, %v626, 0.0
      %630 = vadd.xlane.f32.xlu0 %v629
      %v631 = vpop.xlane.xlu0 %630
      %v632 = vrcp.pop 32.0
      %v633 = vmul.f32 32.0, %v632
      %v634 = vsub.f32 1.0, %v633
      %v635 = vmul.f32 %v632, %v634
      %v636 = vadd.f32 %v632, %v635
      %vm637 = vweird.f32 %v632
      %v638 = vsel %vm637, %v632, %v636
      %v639 = vmul.f32 %v631, %v638
      %v640 = vsub.f32 %v626, %v639
      %v641 = vmul.f32 %v640, %v640
      %v642 = vsel %vm476, %v641, 0.0
      %643 = vadd.xlane.f32.xlu0 %v642
      %v644 = vpop.xlane.xlu0 %643
      %v645 = vmul.f32 %v644, %v638
      %v646 = vadd.f32 %v645, 1e-05
      %v647 = vrsqrt.pop %v646
      %v648 = vmul.f32 %v647, %v646
      %v649 = vmul.f32 %v648, %v647
      %v650 = vmul.f32 0.5, %v649
      %v651 = vsub.f32 1.5, %v650
      %v652 = vmul.f32 %v647, %v651
      %vm653 = vweird.f32 %v646
      %vm654 = vweird.f32 %v647
      %vm655 = vmor %vm653, %vm654
      %v656 = vsel %vm655, %v647, %v652
      %v657 = vmul.f32 %v640, %v656
      %v659 = vperm.slane %v627, 0
      %v661 = vmul.f32 %v657, %v659
      %v663 = vperm.slane %v628, 0
      %v665 = vadd.f32 %v661, %v663
      %v666 = vpack.c.bf16 %v665, %v665
      %vm667 = vcmask 257024
      %668 = vst.msk [vmem:[%s404] sm:$0xf] %vm667, %v666
      %p669 = scmp.lt.s32.totalorder %s27, 1
      %s670 = scalar_select %p669, %s27, 1
      %p671 = scmp.lt.s32.totalorder %s28, 0
      %s672 = scalar_select %p671, %s28, 0
      %s673 = sadd.s32 %s672, %s670
      %s674 = smul.addr %s673, 4
      %s675 = scalar_lea.vmem %s11, %s674
      // Predicated region
      $region79: #{transformer_causal_forward.7} parent=59 // pred_check
        %p676 = pneg %p277
      $region80: #{transformer_causal_forward.7} parent=59 // pred_check_branch
        %678 = sbr.rel (%p676) target = $region82
      $region81: #{transformer_causal_forward.7} parent=59 // pred_region
        _
      $region82: #{transformer_causal_forward.7} parent=59 // pred_fallthru
        _
    $region60: #{transformer_causal_forward.7} parent=5 // pred_fallthru
      _
    %p679 = scmp.le.s32.totalorder 2, %s18
    // Predicated region
    $region83: #{transformer_causal_forward.7} parent=5 // pred_check
      %p680 = pneg %p679
    $region84: #{transformer_causal_forward.7} parent=5 // pred_check_branch
      %682 = sbr.rel (%p680) target = $region86
    $region85: #{transformer_causal_forward.7} parent=5 // pred_region
      %s683 = ssub.s32 %s18, 2
      // Predicated region
      $region87: #{transformer_causal_forward.7} parent=85 // pred_check
        %p684 = pneg %p283
      $region88: #{transformer_causal_forward.7} parent=85 // pred_check_branch
        %686 = sbr.rel (%p684) target = $region90
      $region89: #{transformer_causal_forward.7} parent=85 // pred_region
        %p687 = scmp.lt.s32.totalorder %s29, 1
        %s688 = scalar_select %p687, %s29, 1
        %p689 = scmp.lt.s32.totalorder %s30, 0
        %s690 = scalar_select %p689, %s30, 0
        %s691 = sadd.s32 %s690, %s688
        %s692 = smul.addr %s691, 4
        %s693 = scalar_lea.vmem %s11, %s692
      $region90: #{transformer_causal_forward.7} parent=85 // pred_fallthru
        _
    $region86: #{transformer_causal_forward.7} parent=5 // pred_fallthru
      _
  $region6: #{transformer_causal_forward.7} parent=0 // loop_footer
    %s22 = sadd.s32 1, %s18
  $region7: #{transformer_causal_forward.7} parent=0 // loop_footer_branch
    %17 = sbr.rel target = $region3
  $region8: #{transformer_causal_forward.7} parent=0 // loop_exit
    _

</llo_original>
